<compile_context>
chip_gen: v6e
topology: v6e:2x2x1
jax: 0.10.0
libtpu: 0.0.40
codegen_flags: <defaults>
</compile_context>

<pallas_src>
import jax
import jax.numpy as jnp
from jax.experimental import pallas as pl
from jax.experimental.pallas import tpu as pltpu

_HIGHEST = jax.lax.Precision.HIGHEST


def _rnn_agent_kernel(x_ref, h0_ref, wf_ref, wih_ref, w2_ref,   # inputs
                      q_ref, hseq_ref,                           # outputs (per step)
                      xh_ref, aug_ref):                          # VMEM scratch
    """One GRU-agent step per grid iteration t.

    Scratch layout (persists across grid steps):
      xh_ref  (B, H+1+D): [ h_{t-1} | 1 | x_t ]  -- the "1" lane feeds the bias row
                                                    of the fused block-diagonal matmul.
      aug_ref (B, H+1)  : [ . | 1 ]              -- staging buffer for [x_relu|1] and
                                                    [h_new|1] (bias-fold ones lane).
    """
    f32 = jnp.float32
    B, H = h0_ref.shape
    D = x_ref.shape[-1]
    t = pl.program_id(0)

    @pl.when(t == 0)
    def _init():
        xh_ref[:, :H] = h0_ref[...]                       # h_{-1}
        xh_ref[:, H:H + 1] = jnp.ones((B, 1), f32)        # constant bias lane
        aug_ref[:, H:H + 1] = jnp.ones((B, 1), f32)       # constant bias lane

    # Stage current observation next to [h | 1] so fc1 and the GRU hidden-side
    # matmul run as ONE block-diagonal MXU pass with biases folded in.
    xh_ref[:, H + 1:] = x_ref[...]
    xh = xh_ref[...]                                      # (B, H+1+D)
    h = xh[:, :H]                                         # h_{t-1}

    #   pre[:, :H]  = x @ W1^T + b1          (fc1 pre-activation)
    #   pre[:, H:]  = h @ W_hh^T + b_hh      (GRU hidden-side gates, biases included)
    pre = jnp.dot(xh, wf_ref[...], precision=_HIGHEST,
                  preferred_element_type=f32)             # (B, 4H) lane-dense
    gh = pre[:, H:]                                       # (B, 3H)

    # gi = relu(fc1) @ W_ih^T + b_ih   (b_ih folded via the ones lane of aug_ref)
    aug_ref[:, :H] = jnp.maximum(pre[:, :H], 0.0)
    gi = jnp.dot(aug_ref[...], wih_ref[...], precision=_HIGHEST,
                 preferred_element_type=f32)              # (B, 3H)

    # PyTorch GRUCell (gate order r, z, n); single sigmoid over the r|z slab.
    rz = jax.nn.sigmoid(gi[:, :2 * H] + gh[:, :2 * H])
    r = rz[:, :H]
    z = rz[:, H:]
    n = jnp.tanh(gi[:, 2 * H:] + r * gh[:, 2 * H:])
    h_new = (1.0 - z) * n + z * h

    # Recurrence carry for step t+1 (stays VMEM-resident, never round-trips HBM).
    xh_ref[:, :H] = h_new

    # q = h_new @ W2^T + b2   (b2 folded via the ones lane)
    aug_ref[:, :H] = h_new
    q = jnp.dot(aug_ref[...], w2_ref[...], precision=_HIGHEST,
                preferred_element_type=f32)               # (B, A)

    q_ref[...] = q.astype(q_ref.dtype)
    hseq_ref[...] = h_new.astype(hseq_ref.dtype)


def prepare_params(params):
    """One-time parameter layout prep (off the per-call hot path).

    Builds three MXU-ready operands:
      w_fused  (H+1+D, 4H): block-diagonal [W_hh^T (->cols H:) | W1^T (->cols :H)]
                            with a bias row carrying [b1 | b_hh]; consumed by [h|1|x].
      w_ih_aug (H+1, 3H)  : [W_ih^T ; b_ih], consumed by [relu(fc1)|1].
      w2_aug   (H+1, A)   : [W2^T   ; b2  ], consumed by [h_new|1].
    """
    f32 = jnp.float32
    w1 = jnp.asarray(params["w1"], f32)       # (H, D)
    w_ih = jnp.asarray(params["w_ih"], f32)   # (3H, H)
    w_hh = jnp.asarray(params["w_hh"], f32)   # (3H, H)
    w2 = jnp.asarray(params["w2"], f32)       # (A, H)
    H, D = w1.shape

    w_fused = jnp.zeros((H + 1 + D, 4 * H), f32)
    w_fused = w_fused.at[:H, H:].set(w_hh.T)                            # h -> gh
    w_fused = w_fused.at[H, :H].set(jnp.asarray(params["b1"], f32))     # bias row
    w_fused = w_fused.at[H, H:].set(jnp.asarray(params["b_hh"], f32))
    w_fused = w_fused.at[H + 1:, :H].set(w1.T)                          # x -> fc1

    w_ih_aug = jnp.concatenate(
        [w_ih.T, jnp.asarray(params["b_ih"], f32)[None, :]], axis=0)    # (H+1, 3H)
    w2_aug = jnp.concatenate(
        [w2.T, jnp.asarray(params["b2"], f32)[None, :]], axis=0)        # (H+1, A)

    return {"w_fused": w_fused, "w_ih_aug": w_ih_aug, "w2_aug": w2_aug}


def _rnn_core(x_seq, h0, prepared):
    """Run T fused GRU-agent steps. x_seq: (T, B, D), h0: (B, H)."""
    wf = prepared["w_fused"]       # (H+1+D, 4H)
    wih = prepared["w_ih_aug"]     # (H+1, 3H)
    w2 = prepared["w2_aug"]        # (H+1, A)
    T, B, D = x_seq.shape
    H = wih.shape[0] - 1
    A = w2.shape[1]

    flops = 2 * T * B * ((H + 1 + D) * 4 * H + (H + 1) * 3 * H + (H + 1) * A)
    bytes_accessed = 4 * (x_seq.size + h0.size + wf.size + wih.size + w2.size
                          + T * B * (A + H))

    grid_spec = pltpu.PrefetchScalarGridSpec(
        num_scalar_prefetch=0,
        grid=(T,),
        in_specs=[
            pl.BlockSpec((None, B, D), lambda t: (t, 0, 0)),   # x_t (per step)
            pl.BlockSpec((B, H), lambda t: (0, 0)),            # h0 (resident)
            pl.BlockSpec(wf.shape, lambda t: (0, 0)),          # weights resident
            pl.BlockSpec(wih.shape, lambda t: (0, 0)),
            pl.BlockSpec(w2.shape, lambda t: (0, 0)),
        ],
        out_specs=(
            pl.BlockSpec((None, B, A), lambda t: (t, 0, 0)),   # q_t
            pl.BlockSpec((None, B, H), lambda t: (t, 0, 0)),   # h_t
        ),
        scratch_shapes=[
            pltpu.VMEM((B, H + 1 + D), jnp.float32),           # [h | 1 | x]
            pltpu.VMEM((B, H + 1), jnp.float32),               # [. | 1] staging
        ],
    )

    return pl.pallas_call(
        _rnn_agent_kernel,
        grid_spec=grid_spec,
        out_shape=(
            jax.ShapeDtypeStruct((T, B, A), jnp.float32),
            jax.ShapeDtypeStruct((T, B, H), jnp.float32),
        ),
        compiler_params=pltpu.CompilerParams(
            dimension_semantics=("arbitrary",)),               # sequential recurrence
        cost_estimate=pl.CostEstimate(
            flops=flops, transcendentals=3 * T * B * H,
            bytes_accessed=bytes_accessed),
    )(x_seq, h0, wf, wih, w2)


@jax.jit
def rnn_agent_forward(inputs, hidden_state, prepared):
    """Single step (matches RNNAgent.forward). inputs: (B, D); returns (q, h)."""
    H = prepared["w_ih_aug"].shape[0] - 1
    h0 = hidden_state.reshape(-1, H)
    q_seq, h_seq = _rnn_core(inputs[None], h0, prepared)
    return q_seq[0], h_seq[0]


@jax.jit
def rnn_agent_rollout(inputs_seq, hidden_state, prepared):
    """T sequential steps fully inside one kernel. inputs_seq: (T, B, D)."""
    H = prepared["w_ih_aug"].shape[0] - 1
    h0 = hidden_state.reshape(-1, H)
    return _rnn_core(inputs_seq, h0, prepared)    # (q_seq (T,B,A), h_seq (T,B,H))


def init_params(key, input_dim, hidden_dim, n_actions):
    """Deterministic PyTorch-style uniform init (synthetic weights)."""
    ks = jax.random.split(key, 8)

    def unif(k, shape, fan_in):
        bound = 1.0 / jnp.sqrt(jnp.float32(fan_in))
        return jax.random.uniform(k, shape, jnp.float32, -bound, bound)

    return {
        "w1": unif(ks[0], (hidden_dim, input_dim), input_dim),
        "b1": unif(ks[1], (hidden_dim,), input_dim),
        "w_ih": unif(ks[2], (3 * hidden_dim, hidden_dim), hidden_dim),
        "w_hh": unif(ks[3], (3 * hidden_dim, hidden_dim), hidden_dim),
        "b_ih": unif(ks[4], (3 * hidden_dim,), hidden_dim),
        "b_hh": unif(ks[5], (3 * hidden_dim,), hidden_dim),
        "w2": unif(ks[6], (n_actions, hidden_dim), hidden_dim),
        "b2": unif(ks[7], (n_actions,), hidden_dim),
    }


def _reference_forward(inputs, hidden_state, params):
    """Pure-JAX reference matching PyTorch RNNAgent.forward (f32, pinned precision)."""
    H = params["w_hh"].shape[1]
    x = jnp.maximum(
        jnp.dot(inputs, params["w1"].T, precision=_HIGHEST) + params["b1"], 0.0)
    h = hidden_state.reshape(-1, H)
    gi = jnp.dot(x, params["w_ih"].T, precision=_HIGHEST) + params["b_ih"]
    gh = jnp.dot(h, params["w_hh"].T, precision=_HIGHEST) + params["b_hh"]
    r = jax.nn.sigmoid(gi[:, :H] + gh[:, :H])
    z = jax.nn.sigmoid(gi[:, H:2 * H] + gh[:, H:2 * H])
    n = jnp.tanh(gi[:, 2 * H:] + r * gh[:, 2 * H:])
    h_new = (1.0 - z) * n + z * h
    q = jnp.dot(h_new, params["w2"].T, precision=_HIGHEST) + params["b2"]
    return q, h_new


if __name__ == "__main__":
    B, INPUT_DIM, HIDDEN, N_ACTIONS, T = 8, 16, 32, 8, 8

    key = jax.random.PRNGKey(0)
    k_params, k_x, k_h, k_seq = jax.random.split(key, 4)

    params = init_params(k_params, INPUT_DIM, HIDDEN, N_ACTIONS)
    prepared = prepare_params(params)  # one-time layout prep (off the hot path)

    inputs = jax.random.normal(k_x, (B, INPUT_DIM), jnp.float32)
    hidden = jax.random.normal(k_h, (B, HIDDEN), jnp.float32)

    # --- single step (module-equivalent forward) ---
    q, h_new = rnn_agent_forward(inputs, hidden, prepared)
    jax.block_until_ready((q, h_new))

    q_ref, h_ref = _reference_forward(inputs, hidden, params)
    assert q.shape == (B, N_ACTIONS) and h_new.shape == (B, HIDDEN)
    assert jnp.allclose(q, q_ref, atol=1e-5, rtol=1e-5)
    assert jnp.allclose(h_new, h_ref, atol=1e-5, rtol=1e-5)

    # --- T-step rollout with the time loop fused inside the kernel ---
    x_seq = jax.random.normal(k_seq, (T, B, INPUT_DIM), jnp.float32)
    q_seq, h_seq = rnn_agent_rollout(x_seq, hidden, prepared)
    jax.block_until_ready((q_seq, h_seq))

    def _scan_step(h, x):
        q_t, h_t = _reference_forward(x, h, params)
        return h_t, (q_t, h_t)

    _, (q_seq_ref, h_seq_ref) = jax.lax.scan(_scan_step, hidden, x_seq)
    assert q_seq.shape == (T, B, N_ACTIONS) and h_seq.shape == (T, B, HIDDEN)
    assert jnp.allclose(q_seq, q_seq_ref, atol=1e-4, rtol=1e-4)
    assert jnp.allclose(h_seq, h_seq_ref, atol=1e-4, rtol=1e-4)

    print("KERNEL_OK")
</pallas_src>

<mosaic_0001>
module attributes {stable_mosaic.version = 11 : i64} {
  func.func @_rnn_agent_kernel(%arg0: i32, %arg1: memref<1x8x16xf32, #tpu.memory_space<vmem>>, %arg2: memref<8x32xf32, #tpu.memory_space<vmem>>, %arg3: memref<49x128xf32, #tpu.memory_space<vmem>>, %arg4: memref<33x96xf32, #tpu.memory_space<vmem>>, %arg5: memref<33x8xf32, #tpu.memory_space<vmem>>, %arg6: memref<1x8x8xf32, #tpu.memory_space<vmem>>, %arg7: memref<1x8x32xf32, #tpu.memory_space<vmem>>, %arg8: memref<8x49xf32, #tpu.memory_space<vmem>>, %arg9: memref<8x33xf32, #tpu.memory_space<vmem>>) attributes {dimension_semantics = [#tpu.dimension_semantics<arbitrary>], iteration_bounds = array<i64: 1>, scalar_prefetch = 0 : i64, scratch_operands = 2 : i64, tpu.core_type = #tpu.core_type<tc>, window_params = [{transform_indices = @transform_0, window_bounds = array<i64: 1, 8, 16>}, {pipeline_mode = #tpu.pipeline_mode<synchronous>, transform_indices = @transform_1, window_bounds = array<i64: 8, 32>}, {pipeline_mode = #tpu.pipeline_mode<synchronous>, transform_indices = @transform_2, window_bounds = array<i64: 49, 128>}, {pipeline_mode = #tpu.pipeline_mode<synchronous>, transform_indices = @transform_3, window_bounds = array<i64: 33, 96>}, {pipeline_mode = #tpu.pipeline_mode<synchronous>, transform_indices = @transform_4, window_bounds = array<i64: 33, 8>}, {transform_indices = @transform_5, window_bounds = array<i64: 1, 8, 8>}, {transform_indices = @transform_6, window_bounds = array<i64: 1, 8, 32>}]} {
    %c0_i32 = arith.constant 0 : i32
    %0 = arith.cmpi eq, %arg0, %c0_i32 : i32
    %1 = arith.extui %0 : i1 to i32
    %c0_i32_0 = arith.constant 0 : i32
    %2 = arith.cmpi ne, %1, %c0_i32_0 : i32
    scf.if %2 {
      %c0_33 = arith.constant 0 : index
      %c0_34 = arith.constant 0 : index
      %49 = vector.load %arg2[%c0_33, %c0_34] : memref<8x32xf32, #tpu.memory_space<vmem>>, vector<8x32xf32>
      %c0_35 = arith.constant 0 : index
      %c0_36 = arith.constant 0 : index
      %50 = vector.load %arg8[%c0_35, %c0_36] : memref<8x49xf32, #tpu.memory_space<vmem>>, vector<8x32xf32>
      tpu.vector_store %arg8[%c0_35, %c0_36], %49 {strides = array<i32>} : memref<8x49xf32, #tpu.memory_space<vmem>>, vector<8x32xf32>,
      %cst_37 = arith.constant 1.000000e+00 : f32
      %51 = vector.broadcast %cst_37 : f32 to vector<8x1xf32>
      %c0_38 = arith.constant 0 : index
      %c32 = arith.constant 32 : index
      %52 = vector.load %arg8[%c0_38, %c32] : memref<8x49xf32, #tpu.memory_space<vmem>>, vector<8x1xf32>
      tpu.vector_store %arg8[%c0_38, %c32], %51 {strides = array<i32>} : memref<8x49xf32, #tpu.memory_space<vmem>>, vector<8x1xf32>,
      %cst_39 = arith.constant 1.000000e+00 : f32
      %53 = vector.broadcast %cst_39 : f32 to vector<8x1xf32>
      %c0_40 = arith.constant 0 : index
      %c32_41 = arith.constant 32 : index
      %54 = vector.load %arg9[%c0_40, %c32_41] : memref<8x33xf32, #tpu.memory_space<vmem>>, vector<8x1xf32>
      tpu.vector_store %arg9[%c0_40, %c32_41], %53 {strides = array<i32>} : memref<8x33xf32, #tpu.memory_space<vmem>>, vector<8x1xf32>,
    } else {
    }
    %c0 = arith.constant 0 : index
    %c0_1 = arith.constant 0 : index
    %c0_2 = arith.constant 0 : index
    %3 = vector.load %arg1[%c0, %c0_1, %c0_2] : memref<1x8x16xf32, #tpu.memory_space<vmem>>, vector<1x8x16xf32>
    %4 = vector.shape_cast %3 : vector<1x8x16xf32> to vector<8x16xf32>
    %c0_3 = arith.constant 0 : index
    %c33 = arith.constant 33 : index
    %5 = vector.load %arg8[%c0_3, %c33] : memref<8x49xf32, #tpu.memory_space<vmem>>, vector<8x16xf32>
    tpu.vector_store %arg8[%c0_3, %c33], %4 {strides = array<i32>} : memref<8x49xf32, #tpu.memory_space<vmem>>, vector<8x16xf32>,
    %c0_4 = arith.constant 0 : index
    %c0_5 = arith.constant 0 : index
    %6 = vector.load %arg8[%c0_4, %c0_5] : memref<8x49xf32, #tpu.memory_space<vmem>>, vector<8x49xf32>
    %7 = vector.extract_strided_slice %6 {offsets = [0, 0], sizes = [8, 32], strides = [1, 1]} : vector<8x49xf32> to vector<8x32xf32>
    %c0_6 = arith.constant 0 : index
    %c0_7 = arith.constant 0 : index
    %8 = vector.load %arg3[%c0_6, %c0_7] : memref<49x128xf32, #tpu.memory_space<vmem>>, vector<49x128xf32>
    %cst = arith.constant dense<0.000000e+00> : vector<8x128xf32>
    %9 = tpu.matmul %6, %8, %cst {dimension_numbers = #tpu.dot_dimension_numbers<[1], [0], [0], [1], [0, 0, 1, 1], [], []>, precision = #tpu.contract_precision<fp32>} : vector<8x49xf32>, vector<49x128xf32>, vector<8x128xf32> -> vector<8x128xf32>
    %10 = vector.extract_strided_slice %9 {offsets = [0, 32], sizes = [8, 96], strides = [1, 1]} : vector<8x128xf32> to vector<8x96xf32>
    %11 = vector.extract_strided_slice %9 {offsets = [0, 0], sizes = [8, 32], strides = [1, 1]} : vector<8x128xf32> to vector<8x32xf32>
    %cst_8 = arith.constant 0.000000e+00 : f32
    %12 = vector.broadcast %cst_8 : f32 to vector<8x32xf32>
    %13 = arith.maximumf %11, %12 : vector<8x32xf32>
    %c0_9 = arith.constant 0 : index
    %c0_10 = arith.constant 0 : index
    %14 = vector.load %arg9[%c0_9, %c0_10] : memref<8x33xf32, #tpu.memory_space<vmem>>, vector<8x32xf32>
    tpu.vector_store %arg9[%c0_9, %c0_10], %13 {strides = array<i32>} : memref<8x33xf32, #tpu.memory_space<vmem>>, vector<8x32xf32>,
    %c0_11 = arith.constant 0 : index
    %c0_12 = arith.constant 0 : index
    %15 = vector.load %arg9[%c0_11, %c0_12] : memref<8x33xf32, #tpu.memory_space<vmem>>, vector<8x33xf32>
    %c0_13 = arith.constant 0 : index
    %c0_14 = arith.constant 0 : index
    %16 = vector.load %arg4[%c0_13, %c0_14] : memref<33x96xf32, #tpu.memory_space<vmem>>, vector<33x96xf32>
    %cst_15 = arith.constant dense<0.000000e+00> : vector<8x96xf32>
    %17 = tpu.matmul %15, %16, %cst_15 {dimension_numbers = #tpu.dot_dimension_numbers<[1], [0], [0], [1], [0, 0, 1, 1], [], []>, precision = #tpu.contract_precision<fp32>} : vector<8x33xf32>, vector<33x96xf32>, vector<8x96xf32> -> vector<8x96xf32>
    %18 = vector.extract_strided_slice %17 {offsets = [0, 0], sizes = [8, 64], strides = [1, 1]} : vector<8x96xf32> to vector<8x64xf32>
    %19 = vector.extract_strided_slice %10 {offsets = [0, 0], sizes = [8, 64], strides = [1, 1]} : vector<8x96xf32> to vector<8x64xf32>
    %20 = arith.addf %18, %19 : vector<8x64xf32>
    %21 = arith.negf %20 : vector<8x64xf32>
    %22 = math.exp %21 : vector<8x64xf32>
    %cst_16 = arith.constant 1.000000e+00 : f32
    %23 = vector.broadcast %cst_16 : f32 to vector<8x64xf32>
    %24 = arith.addf %23, %22 : vector<8x64xf32>
    %25 = arith.divf %23, %24 : vector<8x64xf32>
    %26 = vector.extract_strided_slice %25 {offsets = [0, 0], sizes = [8, 32], strides = [1, 1]} : vector<8x64xf32> to vector<8x32xf32>
    %27 = vector.extract_strided_slice %25 {offsets = [0, 32], sizes = [8, 32], strides = [1, 1]} : vector<8x64xf32> to vector<8x32xf32>
    %28 = vector.extract_strided_slice %17 {offsets = [0, 64], sizes = [8, 32], strides = [1, 1]} : vector<8x96xf32> to vector<8x32xf32>
    %29 = vector.extract_strided_slice %10 {offsets = [0, 64], sizes = [8, 32], strides = [1, 1]} : vector<8x96xf32> to vector<8x32xf32>
    %30 = arith.mulf %26, %29 : vector<8x32xf32>
    %31 = arith.addf %28, %30 : vector<8x32xf32>
    %32 = math.tanh %31 : vector<8x32xf32>
    %cst_17 = arith.constant 1.000000e+00 : f32
    %33 = vector.broadcast %cst_17 : f32 to vector<8x32xf32>
    %34 = arith.subf %33, %27 : vector<8x32xf32>
    %35 = arith.mulf %34, %32 : vector<8x32xf32>
    %36 = arith.mulf %27, %7 : vector<8x32xf32>
    %37 = arith.addf %35, %36 : vector<8x32xf32>
    %c0_18 = arith.constant 0 : index
    %c0_19 = arith.constant 0 : index
    %38 = vector.load %arg8[%c0_18, %c0_19] : memref<8x49xf32, #tpu.memory_space<vmem>>, vector<8x32xf32>
    tpu.vector_store %arg8[%c0_18, %c0_19], %37 {strides = array<i32>} : memref<8x49xf32, #tpu.memory_space<vmem>>, vector<8x32xf32>,
    %c0_20 = arith.constant 0 : index
    %c0_21 = arith.constant 0 : index
    %39 = vector.load %arg9[%c0_20, %c0_21] : memref<8x33xf32, #tpu.memory_space<vmem>>, vector<8x32xf32>
    tpu.vector_store %arg9[%c0_20, %c0_21], %37 {strides = array<i32>} : memref<8x33xf32, #tpu.memory_space<vmem>>, vector<8x32xf32>,
    %c0_22 = arith.constant 0 : index
    %c0_23 = arith.constant 0 : index
    %40 = vector.load %arg9[%c0_22, %c0_23] : memref<8x33xf32, #tpu.memory_space<vmem>>, vector<8x33xf32>
    %c0_24 = arith.constant 0 : index
    %c0_25 = arith.constant 0 : index
    %41 = vector.load %arg5[%c0_24, %c0_25] : memref<33x8xf32, #tpu.memory_space<vmem>>, vector<33x8xf32>
    %cst_26 = arith.constant dense<0.000000e+00> : vector<8x8xf32>
    %42 = tpu.matmul %40, %41, %cst_26 {dimension_numbers = #tpu.dot_dimension_numbers<[1], [0], [0], [1], [0, 0, 1, 1], [], []>, precision = #tpu.contract_precision<fp32>} : vector<8x33xf32>, vector<33x8xf32>, vector<8x8xf32> -> vector<8x8xf32>
    %c0_27 = arith.constant 0 : index
    %c0_28 = arith.constant 0 : index
    %c0_29 = arith.constant 0 : index
    %43 = vector.load %arg6[%c0_27, %c0_28, %c0_29] : memref<1x8x8xf32, #tpu.memory_space<vmem>>, vector<1x8x8xf32>
    %44 = vector.shape_cast %43 : vector<1x8x8xf32> to vector<8x8xf32>
    %45 = vector.shape_cast %42 : vector<8x8xf32> to vector<1x8x8xf32>
    tpu.vector_store %arg6[%c0_27, %c0_28, %c0_29], %45 {strides = array<i32>} : memref<1x8x8xf32, #tpu.memory_space<vmem>>, vector<1x8x8xf32>,
    %c0_30 = arith.constant 0 : index
    %c0_31 = arith.constant 0 : index
    %c0_32 = arith.constant 0 : index
    %46 = vector.load %arg7[%c0_30, %c0_31, %c0_32] : memref<1x8x32xf32, #tpu.memory_space<vmem>>, vector<1x8x32xf32>
    %47 = vector.shape_cast %46 : vector<1x8x32xf32> to vector<8x32xf32>
    %48 = vector.shape_cast %37 : vector<8x32xf32> to vector<1x8x32xf32>
    tpu.vector_store %arg7[%c0_30, %c0_31, %c0_32], %48 {strides = array<i32>} : memref<1x8x32xf32, #tpu.memory_space<vmem>>, vector<1x8x32xf32>,
    return
  }
  func.func @transform_0(%arg0: i32) -> (i32, i32, i32) {
    %c0_i32 = arith.constant 0 : i32
    %c0_i32_0 = arith.constant 0 : i32
    %c0_i32_1 = arith.constant 0 : i32
    return %arg0, %c0_i32, %c0_i32_0 : i32, i32, i32
  }
  func.func @transform_1(%arg0: i32) -> (i32, i32) {
    %c0_i32 = arith.constant 0 : i32
    %c0_i32_0 = arith.constant 0 : i32
    %c0_i32_1 = arith.constant 0 : i32
    return %c0_i32, %c0_i32_0 : i32, i32
  }
  func.func @transform_2(%arg0: i32) -> (i32, i32) {
    %c0_i32 = arith.constant 0 : i32
    %c0_i32_0 = arith.constant 0 : i32
    %c0_i32_1 = arith.constant 0 : i32
    return %c0_i32, %c0_i32_0 : i32, i32
  }
  func.func @transform_3(%arg0: i32) -> (i32, i32) {
    %c0_i32 = arith.constant 0 : i32
    %c0_i32_0 = arith.constant 0 : i32
    %c0_i32_1 = arith.constant 0 : i32
    return %c0_i32, %c0_i32_0 : i32, i32
  }
  func.func @transform_4(%arg0: i32) -> (i32, i32) {
    %c0_i32 = arith.constant 0 : i32
    %c0_i32_0 = arith.constant 0 : i32
    %c0_i32_1 = arith.constant 0 : i32
    return %c0_i32, %c0_i32_0 : i32, i32
  }
  func.func @transform_5(%arg0: i32) -> (i32, i32, i32) {
    %c0_i32 = arith.constant 0 : i32
    %c0_i32_0 = arith.constant 0 : i32
    %c0_i32_1 = arith.constant 0 : i32
    return %arg0, %c0_i32, %c0_i32_0 : i32, i32, i32
  }
  func.func @transform_6(%arg0: i32) -> (i32, i32, i32) {
    %c0_i32 = arith.constant 0 : i32
    %c0_i32_0 = arith.constant 0 : i32
    %c0_i32_1 = arith.constant 0 : i32
    return %arg0, %c0_i32, %c0_i32_0 : i32, i32, i32
  }
}

</mosaic_0001>

<llo_original>
// kernel: rnn_agent_forward.1
$region0: #{rnn_agent_forward.1}
  #allocation0 [shape = 'u32[]', space=smem, size = 0x4, offset = 0x4, fixed_abs, tag = 'smem constant byte address 0x4 - core index']
  #allocation1 [shape = 'u32[144,128]{1,0:T(1,128)}', space=vmem, size = 0x12000, scoped, tag = 'internal scratch']
  #allocation2 [shape = 'f32[8,49]{1,0:T(8,128)}', space=vmem, size = 0x1000, scoped, tag = 'scratch operand']
  #allocation3 [shape = 'f32[8,33]{1,0:T(8,128)}', space=vmem, size = 0x1000, scoped, tag = 'scratch operand']
  %s0 = inlined_call_operand.vmem [shape: f32[1,8,16], index: 0, kind: input, shape index: {}]
  %s1 = inlined_call_operand.vmem [shape: f32[8,32], index: 1, kind: input, shape index: {}]
  %s2 = inlined_call_operand.hbm [shape: f32[49,128], index: 2, kind: input, shape index: {}]
  %s3 = inlined_call_operand.vmem [shape: f32[33,96], index: 3, kind: input, shape index: {}]
  %s4 = inlined_call_operand.vmem [shape: f32[33,8], index: 4, kind: input, shape index: {}]
  %s5 = inlined_call_operand.hbm [shape: f32[1,8,8], index: 5, kind: output, shape index: {0}]
  %s6 = inlined_call_operand.hbm [shape: f32[1,8,32], index: 6, kind: output, shape index: {1}]
  %7 = xla_tuple %s5, %s6
  %s8 = sld [smem:[#allocation0]]
  $region46: #{rnn_agent_forward.1} parent=0
    _
  %s10 = ssub.s32 1, %s8
  %s11 = scalar_select 0, %s10, %s8
  $region1: #{rnn_agent_forward.1} parent=0
    #allocation4 [shape = 'u8[28672]{0}', space=vmem, size = 0x7000, scoped, tag = 'input window, operand 2, single buffered']
    #allocation5 [shape = 's32[1]{0}', space=sflag, size = 0x4, scoped, tag = 'scoped memory for rnn_agent_forward.1']
    #allocation6 [shape = 's32[1]{0}', space=sflag, size = 0x4, scoped, tag = 'scoped memory for rnn_agent_forward.1']
    #allocation7 [shape = 'u8[4096]{0}', space=vmem, size = 0x1000, scoped, tag = 'output window, operand 0, single buffered']
    #allocation8 [shape = 'u8[4096]{0}', space=vmem, size = 0x1000, scoped, tag = 'output window, operand 1, single buffered']
    #allocation9 [shape = 's32[1]{0}', space=sflag, size = 0x4, scoped, tag = 'scoped memory for rnn_agent_forward.1']
    %12 = vsyncpa [#allocation5], 0
    %13 = vsyncpa [#allocation6], 0
    %14 = vsyncpa [#allocation9], 0
    // Predicated region
    $region2: #{rnn_agent_forward.1} parent=1 // pred_check
      _
    $region3: #{rnn_agent_forward.1} parent=1 // pred_check_branch
      %16 = sbr.rel (0) target = $region5
    $region4: #{rnn_agent_forward.1} parent=1 // pred_region
      _
    $region5: #{rnn_agent_forward.1} parent=1 // pred_fallthru
      _
    // Predicated region
    $region6: #{rnn_agent_forward.1} parent=1 // pred_check
      _
    $region7: #{rnn_agent_forward.1} parent=1 // pred_check_branch
      %18 = sbr.rel (0) target = $region9
    $region8: #{rnn_agent_forward.1} parent=1 // pred_region
      _
    $region9: #{rnn_agent_forward.1} parent=1 // pred_fallthru
      _
    // Predicated region
    $region10: #{rnn_agent_forward.1} parent=1 // pred_check
      _
    $region11: #{rnn_agent_forward.1} parent=1 // pred_check_branch
      %20 = sbr.rel (0) target = $region13
    $region12: #{rnn_agent_forward.1} parent=1 // pred_region
      %s22 = ssub.s32 896, 896
      %23 = vsyncadd [#allocation5], %s22
      %s24 = sshll.u32 [#allocation4], 4
      %s25 = int_to_ptr.vmem [resolvable:$true] %s24
      %30 = dma.hbm_to_vmem [thread:$0]  %s2, 896, %s25, [#allocation5], 128, 128, 8
    $region13: #{rnn_agent_forward.1} parent=1 // pred_fallthru
      _
    // Predicated region
    $region14: #{rnn_agent_forward.1} parent=1 // pred_check
      _
    $region15: #{rnn_agent_forward.1} parent=1 // pred_check_branch
      %32 = sbr.rel (0) target = $region17
    $region16: #{rnn_agent_forward.1} parent=1 // pred_region
      _
    $region17: #{rnn_agent_forward.1} parent=1 // pred_fallthru
      _
    // Predicated region
    $region18: #{rnn_agent_forward.1} parent=1 // pred_check
      _
    $region19: #{rnn_agent_forward.1} parent=1 // pred_check_branch
      %34 = sbr.rel (0) target = $region21
    $region20: #{rnn_agent_forward.1} parent=1 // pred_region
      _
    $region21: #{rnn_agent_forward.1} parent=1 // pred_fallthru
      _
    // Predicated region
    $region22: #{rnn_agent_forward.1} parent=1 // pred_check
      _
    $region23: #{rnn_agent_forward.1} parent=1 // pred_check_branch
      %36 = sbr.rel (0) target = $region25
    $region24: #{rnn_agent_forward.1} parent=1 // pred_region
      %37 = dma.done [#allocation5], 896
    $region25: #{rnn_agent_forward.1} parent=1 // pred_fallthru
      _
    %p38 = scmp.eq.s32.totalorder 0, 0
    // Predicated region
    $region26: #{rnn_agent_forward.1} parent=1 // pred_check
      %p39 = pneg %p38
    $region27: #{rnn_agent_forward.1} parent=1 // pred_check_branch
      %41 = sbr.rel (%p39) target = $region29
    $region28: #{rnn_agent_forward.1} parent=1 // pred_region
      %v42 = vld [vmem:[%s1] sm:$0xff]
      %vm43 = vcmask 261120
      %44 = vst.msk [vmem:[#allocation2] sm:$0xff] %vm43, %v42
      %vm45 = vcmask 269568
      %46 = vst.msk [vmem:[#allocation2] sm:$0xff] %vm45, 1.0
      %47 = vst.msk [vmem:[#allocation3] sm:$0xff] %vm45, 1.0
    $region29: #{rnn_agent_forward.1} parent=1 // pred_fallthru
      _
    %v48 = vld [vmem:[%s0] sm:$0xff]
    %50 = vrot.lane.b32.xlu0 %v48, 33
    %v51 = vpop.permute.xlu0 %50
    %vm53 = vcmask 400648
    %54 = vst.msk [vmem:[#allocation2] sm:$0xff] %vm53, %v51
    %v55 = vld [vmem:[#allocation2] sm:$0xff]
    %v56 = vld [vmem:[#allocation4] sm:$0xff]
    %v57 = vld [vmem:[#allocation4 + $0x8] sm:$0xff]
    %v58 = vld [vmem:[#allocation4 + $0x10] sm:$0xff]
    %v59 = vld [vmem:[#allocation4 + $0x18] sm:$0xff]
    %v60 = vld [vmem:[#allocation4 + $0x20] sm:$0xff]
    %v61 = vld [vmem:[#allocation4 + $0x28] sm:$0xff]
    %v62 = vld [vmem:[#allocation4 + $0x30] sm:$0x1]
    %vm63 = vcmask 400384
    %v65 = vsel %vm63, %v55, 0
    %vm67 = vcmask 1040384
    %v69 = vsel %vm67, %v62, 0
    %71 = vmatprep.subr.mxu0 0.0
    %72 = vmatpush1.msra.mxu0 0.0
    %73 = vmatprep.subr.mxu0 0.0
    %74 = vmatpush1.msra.mxu0 0.0
    %75 = vmatprep.subr.mxu0 0.0
    %76 = vmatpush1.msra.mxu0 0.0
    %77 = vmatprep.subr.mxu0 0.0
    %78 = vmatpush1.msra.mxu0 0.0
    %79 = vmatprep.subr.mxu0 0.0
    %80 = vmatpush1.msra.mxu0 0.0
    %81 = vmatprep.subr.mxu0 0.0
    %82 = vmatpush1.msra.mxu0 0.0
    %83 = vmatprep.subr.mxu0 0.0
    %84 = vmatpush1.msra.mxu0 0.0
    %85 = vmatprep.subr.mxu0 0.0
    %86 = vmatpush1.msra.mxu0 0.0
    %87 = vmatprep.subr.mxu0 0.0
    %88 = vmatpush1.msra.mxu0 0.0
    %89 = vmatprep.subr.mxu0 0.0
    %v90 = vand.u32 %v69, 4294901760
    %91 = vmatpush1.msra.mxu0 %v90
    %92 = vmatprep.subr.mxu0 0.0
    %v93 = vand.u32 %v61, 4294901760
    %94 = vmatpush1.msra.mxu0 %v93
    %95 = vmatprep.subr.mxu0 0.0
    %v96 = vand.u32 %v60, 4294901760
    %97 = vmatpush1.msra.mxu0 %v96
    %98 = vmatprep.subr.mxu0 0.0
    %v99 = vand.u32 %v59, 4294901760
    %100 = vmatpush1.msra.mxu0 %v99
    %101 = vmatprep.subr.mxu0 0.0
    %v102 = vand.u32 %v58, 4294901760
    %103 = vmatpush1.msra.mxu0 %v102
    %104 = vmatprep.subr.mxu0 0.0
    %v105 = vand.u32 %v57, 4294901760
    %106 = vmatpush1.msra.mxu0 %v105
    %107 = vmatprep.subr.mxu0 0.0
    %v108 = vand.u32 %v56, 4294901760
    %109 = vmatpush1.msra.mxu0 %v108
    %110 = vmatprep.subr.mxu0 0.0
    %111 = vmatpush2.msra.mxu0 0.0
    %112 = vmatprep.subr.mxu0 0.0
    %113 = vmatpush2.msra.mxu0 0.0
    %114 = vmatprep.subr.mxu0 0.0
    %115 = vmatpush2.msra.mxu0 0.0
    %116 = vmatprep.subr.mxu0 0.0
    %117 = vmatpush2.msra.mxu0 0.0
    %118 = vmatprep.subr.mxu0 0.0
    %119 = vmatpush2.msra.mxu0 0.0
    %120 = vmatprep.subr.mxu0 0.0
    %121 = vmatpush2.msra.mxu0 0.0
    %122 = vmatprep.subr.mxu0 0.0
    %123 = vmatpush2.msra.mxu0 0.0
    %124 = vmatprep.subr.mxu0 0.0
    %125 = vmatpush2.msra.mxu0 0.0
    %126 = vmatprep.subr.mxu0 0.0
    %127 = vmatpush2.msra.mxu0 0.0
    %128 = vmatprep.subr.mxu0 0.0
    %129 = vmatpush2.msra.mxu0 0.0
    %130 = vmatprep.subr.mxu0 0.0
    %131 = vmatpush2.msra.mxu0 0.0
    %132 = vmatprep.subr.mxu0 0.0
    %133 = vmatpush2.msra.mxu0 0.0
    %134 = vmatprep.subr.mxu0 0.0
    %135 = vmatpush2.msra.mxu0 0.0
    %136 = vmatprep.subr.mxu0 0.0
    %137 = vmatpush2.msra.mxu0 0.0
    %138 = vmatprep.subr.mxu0 0.0
    %139 = vmatpush2.msra.mxu0 0.0
    %140 = vmatprep.subr.mxu0 0.0
    %141 = vmatpush2.msra.mxu0 0.0
    %142 = vmatprep.mubr.f32.mxu0 0.0
    %v143 = vand.u32 %v65, 4294901760
    %v144 = vsub.f32 %v65, %v143
    %v145 = vand.u32 %v144, 4294901760
    %v146 = vsub.f32 %v144, %v145
    %v147 = vand.u32 %v146, 4294901760
    %148 = vmatmul.mubr.f32.gmra.mxu0 %v147
    %v149 = vpop.f32.mrf.mxu0
    %v150 = vadd.f32 0.0, %v149
    %v151 = vpop.f32.mrf.mxu0
    %152 = vdwg.mxu0
    %153 = vmatprep.subr.mxu0 0.0
    %154 = vmatpush1.msra.mxu0 0.0
    %155 = vmatprep.subr.mxu0 0.0
    %156 = vmatpush1.msra.mxu0 0.0
    %157 = vmatprep.subr.mxu0 0.0
    %158 = vmatpush1.msra.mxu0 0.0
    %159 = vmatprep.subr.mxu0 0.0
    %160 = vmatpush1.msra.mxu0 0.0
    %161 = vmatprep.subr.mxu0 0.0
    %162 = vmatpush1.msra.mxu0 0.0
    %163 = vmatprep.subr.mxu0 0.0
    %164 = vmatpush1.msra.mxu0 0.0
    %165 = vmatprep.subr.mxu0 0.0
    %166 = vmatpush1.msra.mxu0 0.0
    %167 = vmatprep.subr.mxu0 0.0
    %168 = vmatpush1.msra.mxu0 0.0
    %169 = vmatprep.subr.mxu0 0.0
    %170 = vmatpush1.msra.mxu0 0.0
    %171 = vmatprep.subr.mxu0 0.0
    %v172 = vand.u32 %v69, 4294901760
    %v173 = vsub.f32 %v69, %v172
    %v174 = vand.u32 %v173, 4294901760
    %v175 = vsub.f32 %v173, %v174
    %v176 = vand.u32 %v175, 4294901760
    %177 = vmatpush1.msra.mxu0 %v176
    %178 = vmatprep.subr.mxu0 0.0
    %v179 = vand.u32 %v61, 4294901760
    %v180 = vsub.f32 %v61, %v179
    %v181 = vand.u32 %v180, 4294901760
    %v182 = vsub.f32 %v180, %v181
    %v183 = vand.u32 %v182, 4294901760
    %184 = vmatpush1.msra.mxu0 %v183
    %185 = vmatprep.subr.mxu0 0.0
    %v186 = vand.u32 %v60, 4294901760
    %v187 = vsub.f32 %v60, %v186
    %v188 = vand.u32 %v187, 4294901760
    %v189 = vsub.f32 %v187, %v188
    %v190 = vand.u32 %v189, 4294901760
    %191 = vmatpush1.msra.mxu0 %v190
    %192 = vmatprep.subr.mxu0 0.0
    %v193 = vand.u32 %v59, 4294901760
    %v194 = vsub.f32 %v59, %v193
    %v195 = vand.u32 %v194, 4294901760
    %v196 = vsub.f32 %v194, %v195
    %v197 = vand.u32 %v196, 4294901760
    %198 = vmatpush1.msra.mxu0 %v197
    %199 = vmatprep.subr.mxu0 0.0
    %v200 = vand.u32 %v58, 4294901760
    %v201 = vsub.f32 %v58, %v200
    %v202 = vand.u32 %v201, 4294901760
    %v203 = vsub.f32 %v201, %v202
    %v204 = vand.u32 %v203, 4294901760
    %205 = vmatpush1.msra.mxu0 %v204
    %206 = vmatprep.subr.mxu0 0.0
    %v207 = vand.u32 %v57, 4294901760
    %v208 = vsub.f32 %v57, %v207
    %v209 = vand.u32 %v208, 4294901760
    %v210 = vsub.f32 %v208, %v209
    %v211 = vand.u32 %v210, 4294901760
    %212 = vmatpush1.msra.mxu0 %v211
    %213 = vmatprep.subr.mxu0 0.0
    %v214 = vand.u32 %v56, 4294901760
    %v215 = vsub.f32 %v56, %v214
    %v216 = vand.u32 %v215, 4294901760
    %v217 = vsub.f32 %v215, %v216
    %v218 = vand.u32 %v217, 4294901760
    %219 = vmatpush1.msra.mxu0 %v218
    %220 = vmatprep.subr.mxu0 0.0
    %221 = vmatpush2.msra.mxu0 0.0
    %222 = vmatprep.subr.mxu0 0.0
    %223 = vmatpush2.msra.mxu0 0.0
    %224 = vmatprep.subr.mxu0 0.0
    %225 = vmatpush2.msra.mxu0 0.0
    %226 = vmatprep.subr.mxu0 0.0
    %227 = vmatpush2.msra.mxu0 0.0
    %228 = vmatprep.subr.mxu0 0.0
    %229 = vmatpush2.msra.mxu0 0.0
    %230 = vmatprep.subr.mxu0 0.0
    %231 = vmatpush2.msra.mxu0 0.0
    %232 = vmatprep.subr.mxu0 0.0
    %233 = vmatpush2.msra.mxu0 0.0
    %234 = vmatprep.subr.mxu0 0.0
    %235 = vmatpush2.msra.mxu0 0.0
    %236 = vmatprep.subr.mxu0 0.0
    %237 = vmatpush2.msra.mxu0 0.0
    %238 = vmatprep.subr.mxu0 0.0
    %239 = vmatpush2.msra.mxu0 0.0
    %240 = vmatprep.subr.mxu0 0.0
    %241 = vmatpush2.msra.mxu0 0.0
    %242 = vmatprep.subr.mxu0 0.0
    %243 = vmatpush2.msra.mxu0 0.0
    %244 = vmatprep.subr.mxu0 0.0
    %245 = vmatpush2.msra.mxu0 0.0
    %246 = vmatprep.subr.mxu0 0.0
    %247 = vmatpush2.msra.mxu0 0.0
    %248 = vmatprep.subr.mxu0 0.0
    %249 = vmatpush2.msra.mxu0 0.0
    %250 = vmatprep.subr.mxu0 0.0
    %251 = vmatpush2.msra.mxu0 0.0
    %252 = vmatprep.mubr.f32.mxu0 0.0
    %v253 = vand.u32 %v65, 4294901760
    %254 = vmatmul.mubr.f32.gmra.mxu0 %v253
    %v255 = vpop.f32.mrf.mxu0
    %v256 = vadd.f32 %v150, %v255
    %v257 = vpop.f32.mrf.mxu0
    %258 = vdwg.mxu0
    %259 = vmatprep.subr.mxu0 0.0
    %260 = vmatpush1.msra.mxu0 0.0
    %261 = vmatprep.subr.mxu0 0.0
    %262 = vmatpush1.msra.mxu0 0.0
    %263 = vmatprep.subr.mxu0 0.0
    %264 = vmatpush1.msra.mxu0 0.0
    %265 = vmatprep.subr.mxu0 0.0
    %266 = vmatpush1.msra.mxu0 0.0
    %267 = vmatprep.subr.mxu0 0.0
    %268 = vmatpush1.msra.mxu0 0.0
    %269 = vmatprep.subr.mxu0 0.0
    %270 = vmatpush1.msra.mxu0 0.0
    %271 = vmatprep.subr.mxu0 0.0
    %272 = vmatpush1.msra.mxu0 0.0
    %273 = vmatprep.subr.mxu0 0.0
    %274 = vmatpush1.msra.mxu0 0.0
    %275 = vmatprep.subr.mxu0 0.0
    %276 = vmatpush1.msra.mxu0 0.0
    %277 = vmatprep.subr.mxu0 0.0
    %v278 = vand.u32 %v69, 4294901760
    %v279 = vsub.f32 %v69, %v278
    %280 = vmatpush1.msra.mxu0 %v279
    %281 = vmatprep.subr.mxu0 0.0
    %v282 = vand.u32 %v61, 4294901760
    %v283 = vsub.f32 %v61, %v282
    %284 = vmatpush1.msra.mxu0 %v283
    %285 = vmatprep.subr.mxu0 0.0
    %v286 = vand.u32 %v60, 4294901760
    %v287 = vsub.f32 %v60, %v286
    %288 = vmatpush1.msra.mxu0 %v287
    %289 = vmatprep.subr.mxu0 0.0
    %v290 = vand.u32 %v59, 4294901760
    %v291 = vsub.f32 %v59, %v290
    %292 = vmatpush1.msra.mxu0 %v291
    %293 = vmatprep.subr.mxu0 0.0
    %v294 = vand.u32 %v58, 4294901760
    %v295 = vsub.f32 %v58, %v294
    %296 = vmatpush1.msra.mxu0 %v295
    %297 = vmatprep.subr.mxu0 0.0
    %v298 = vand.u32 %v57, 4294901760
    %v299 = vsub.f32 %v57, %v298
    %300 = vmatpush1.msra.mxu0 %v299
    %301 = vmatprep.subr.mxu0 0.0
    %v302 = vand.u32 %v56, 4294901760
    %v303 = vsub.f32 %v56, %v302
    %304 = vmatpush1.msra.mxu0 %v303
    %305 = vmatprep.subr.mxu0 0.0
    %306 = vmatpush2.msra.mxu0 0.0
    %307 = vmatprep.subr.mxu0 0.0
    %308 = vmatpush2.msra.mxu0 0.0
    %309 = vmatprep.subr.mxu0 0.0
    %310 = vmatpush2.msra.mxu0 0.0
    %311 = vmatprep.subr.mxu0 0.0
    %312 = vmatpush2.msra.mxu0 0.0
    %313 = vmatprep.subr.mxu0 0.0
    %314 = vmatpush2.msra.mxu0 0.0
    %315 = vmatprep.subr.mxu0 0.0
    %316 = vmatpush2.msra.mxu0 0.0
    %317 = vmatprep.subr.mxu0 0.0
    %318 = vmatpush2.msra.mxu0 0.0
    %319 = vmatprep.subr.mxu0 0.0
    %320 = vmatpush2.msra.mxu0 0.0
    %321 = vmatprep.subr.mxu0 0.0
    %322 = vmatpush2.msra.mxu0 0.0
    %323 = vmatprep.subr.mxu0 0.0
    %324 = vmatpush2.msra.mxu0 0.0
    %325 = vmatprep.subr.mxu0 0.0
    %326 = vmatpush2.msra.mxu0 0.0
    %327 = vmatprep.subr.mxu0 0.0
    %328 = vmatpush2.msra.mxu0 0.0
    %329 = vmatprep.subr.mxu0 0.0
    %330 = vmatpush2.msra.mxu0 0.0
    %331 = vmatprep.subr.mxu0 0.0
    %332 = vmatpush2.msra.mxu0 0.0
    %333 = vmatprep.subr.mxu0 0.0
    %334 = vmatpush2.msra.mxu0 0.0
    %335 = vmatprep.subr.mxu0 0.0
    %336 = vmatpush2.msra.mxu0 0.0
    %337 = vmatprep.mubr.f32.mxu0 0.0
    %v338 = vand.u32 %v65, 4294901760
    %v339 = vsub.f32 %v65, %v338
    %340 = vmatmul.mubr.f32.gmra.mxu0 %v339
    %v341 = vpop.f32.mrf.mxu0
    %v342 = vadd.f32 %v256, %v341
    %v343 = vpop.f32.mrf.mxu0
    %344 = vdwg.mxu0
    %345 = vmatprep.subr.mxu0 0.0
    %346 = vmatpush1.msra.mxu0 0.0
    %347 = vmatprep.subr.mxu0 0.0
    %348 = vmatpush1.msra.mxu0 0.0
    %349 = vmatprep.subr.mxu0 0.0
    %350 = vmatpush1.msra.mxu0 0.0
    %351 = vmatprep.subr.mxu0 0.0
    %352 = vmatpush1.msra.mxu0 0.0
    %353 = vmatprep.subr.mxu0 0.0
    %354 = vmatpush1.msra.mxu0 0.0
    %355 = vmatprep.subr.mxu0 0.0
    %356 = vmatpush1.msra.mxu0 0.0
    %357 = vmatprep.subr.mxu0 0.0
    %358 = vmatpush1.msra.mxu0 0.0
    %359 = vmatprep.subr.mxu0 0.0
    %360 = vmatpush1.msra.mxu0 0.0
    %361 = vmatprep.subr.mxu0 0.0
    %362 = vmatpush1.msra.mxu0 0.0
    %363 = vmatprep.subr.mxu0 0.0
    %v364 = vand.u32 %v69, 4294901760
    %365 = vmatpush1.msra.mxu0 %v364
    %366 = vmatprep.subr.mxu0 0.0
    %v367 = vand.u32 %v61, 4294901760
    %368 = vmatpush1.msra.mxu0 %v367
    %369 = vmatprep.subr.mxu0 0.0
    %v370 = vand.u32 %v60, 4294901760
    %371 = vmatpush1.msra.mxu0 %v370
    %372 = vmatprep.subr.mxu0 0.0
    %v373 = vand.u32 %v59, 4294901760
    %374 = vmatpush1.msra.mxu0 %v373
    %375 = vmatprep.subr.mxu0 0.0
    %v376 = vand.u32 %v58, 4294901760
    %377 = vmatpush1.msra.mxu0 %v376
    %378 = vmatprep.subr.mxu0 0.0
    %v379 = vand.u32 %v57, 4294901760
    %380 = vmatpush1.msra.mxu0 %v379
    %381 = vmatprep.subr.mxu0 0.0
    %v382 = vand.u32 %v56, 4294901760
    %383 = vmatpush1.msra.mxu0 %v382
    %384 = vmatprep.subr.mxu0 0.0
    %385 = vmatpush2.msra.mxu0 0.0
    %386 = vmatprep.subr.mxu0 0.0
    %387 = vmatpush2.msra.mxu0 0.0
    %388 = vmatprep.subr.mxu0 0.0
    %389 = vmatpush2.msra.mxu0 0.0
    %390 = vmatprep.subr.mxu0 0.0
    %391 = vmatpush2.msra.mxu0 0.0
    %392 = vmatprep.subr.mxu0 0.0
    %393 = vmatpush2.msra.mxu0 0.0
    %394 = vmatprep.subr.mxu0 0.0
    %395 = vmatpush2.msra.mxu0 0.0
    %396 = vmatprep.subr.mxu0 0.0
    %397 = vmatpush2.msra.mxu0 0.0
    %398 = vmatprep.subr.mxu0 0.0
    %399 = vmatpush2.msra.mxu0 0.0
    %400 = vmatprep.subr.mxu0 0.0
    %401 = vmatpush2.msra.mxu0 0.0
    %402 = vmatprep.subr.mxu0 0.0
    %403 = vmatpush2.msra.mxu0 0.0
    %404 = vmatprep.subr.mxu0 0.0
    %405 = vmatpush2.msra.mxu0 0.0
    %406 = vmatprep.subr.mxu0 0.0
    %407 = vmatpush2.msra.mxu0 0.0
    %408 = vmatprep.subr.mxu0 0.0
    %409 = vmatpush2.msra.mxu0 0.0
    %410 = vmatprep.subr.mxu0 0.0
    %411 = vmatpush2.msra.mxu0 0.0
    %412 = vmatprep.subr.mxu0 0.0
    %413 = vmatpush2.msra.mxu0 0.0
    %414 = vmatprep.subr.mxu0 0.0
    %415 = vmatpush2.msra.mxu0 0.0
    %416 = vmatprep.mubr.f32.mxu0 0.0
    %v417 = vand.u32 %v65, 4294901760
    %v418 = vsub.f32 %v65, %v417
    %v419 = vand.u32 %v418, 4294901760
    %420 = vmatmul.mubr.f32.gmra.mxu0 %v419
    %v421 = vpop.f32.mrf.mxu0
    %v422 = vadd.f32 %v342, %v421
    %v423 = vpop.f32.mrf.mxu0
    %424 = vdwg.mxu0
    %425 = vmatprep.subr.mxu0 0.0
    %426 = vmatpush1.msra.mxu0 0.0
    %427 = vmatprep.subr.mxu0 0.0
    %428 = vmatpush1.msra.mxu0 0.0
    %429 = vmatprep.subr.mxu0 0.0
    %430 = vmatpush1.msra.mxu0 0.0
    %431 = vmatprep.subr.mxu0 0.0
    %432 = vmatpush1.msra.mxu0 0.0
    %433 = vmatprep.subr.mxu0 0.0
    %434 = vmatpush1.msra.mxu0 0.0
    %435 = vmatprep.subr.mxu0 0.0
    %436 = vmatpush1.msra.mxu0 0.0
    %437 = vmatprep.subr.mxu0 0.0
    %438 = vmatpush1.msra.mxu0 0.0
    %439 = vmatprep.subr.mxu0 0.0
    %440 = vmatpush1.msra.mxu0 0.0
    %441 = vmatprep.subr.mxu0 0.0
    %442 = vmatpush1.msra.mxu0 0.0
    %443 = vmatprep.subr.mxu0 0.0
    %v444 = vand.u32 %v69, 4294901760
    %v445 = vsub.f32 %v69, %v444
    %v446 = vand.u32 %v445, 4294901760
    %447 = vmatpush1.msra.mxu0 %v446
    %448 = vmatprep.subr.mxu0 0.0
    %v449 = vand.u32 %v61, 4294901760
    %v450 = vsub.f32 %v61, %v449
    %v451 = vand.u32 %v450, 4294901760
    %452 = vmatpush1.msra.mxu0 %v451
    %453 = vmatprep.subr.mxu0 0.0
    %v454 = vand.u32 %v60, 4294901760
    %v455 = vsub.f32 %v60, %v454
    %v456 = vand.u32 %v455, 4294901760
    %457 = vmatpush1.msra.mxu0 %v456
    %458 = vmatprep.subr.mxu0 0.0
    %v459 = vand.u32 %v59, 4294901760
    %v460 = vsub.f32 %v59, %v459
    %v461 = vand.u32 %v460, 4294901760
    %462 = vmatpush1.msra.mxu0 %v461
    %463 = vmatprep.subr.mxu0 0.0
    %v464 = vand.u32 %v58, 4294901760
    %v465 = vsub.f32 %v58, %v464
    %v466 = vand.u32 %v465, 4294901760
    %467 = vmatpush1.msra.mxu0 %v466
    %468 = vmatprep.subr.mxu0 0.0
    %v469 = vand.u32 %v57, 4294901760
    %v470 = vsub.f32 %v57, %v469
    %v471 = vand.u32 %v470, 4294901760
    %472 = vmatpush1.msra.mxu0 %v471
    %473 = vmatprep.subr.mxu0 0.0
    %v474 = vand.u32 %v56, 4294901760
    %v475 = vsub.f32 %v56, %v474
    %v476 = vand.u32 %v475, 4294901760
    %477 = vmatpush1.msra.mxu0 %v476
    %478 = vmatprep.subr.mxu0 0.0
    %479 = vmatpush2.msra.mxu0 0.0
    %480 = vmatprep.subr.mxu0 0.0
    %481 = vmatpush2.msra.mxu0 0.0
    %482 = vmatprep.subr.mxu0 0.0
    %483 = vmatpush2.msra.mxu0 0.0
    %484 = vmatprep.subr.mxu0 0.0
    %485 = vmatpush2.msra.mxu0 0.0
    %486 = vmatprep.subr.mxu0 0.0
    %487 = vmatpush2.msra.mxu0 0.0
    %488 = vmatprep.subr.mxu0 0.0
    %489 = vmatpush2.msra.mxu0 0.0
    %490 = vmatprep.subr.mxu0 0.0
    %491 = vmatpush2.msra.mxu0 0.0
    %492 = vmatprep.subr.mxu0 0.0
    %493 = vmatpush2.msra.mxu0 0.0
    %494 = vmatprep.subr.mxu0 0.0
    %495 = vmatpush2.msra.mxu0 0.0
    %496 = vmatprep.subr.mxu0 0.0
    %497 = vmatpush2.msra.mxu0 0.0
    %498 = vmatprep.subr.mxu0 0.0
    %499 = vmatpush2.msra.mxu0 0.0
    %500 = vmatprep.subr.mxu0 0.0
    %501 = vmatpush2.msra.mxu0 0.0
    %502 = vmatprep.subr.mxu0 0.0
    %503 = vmatpush2.msra.mxu0 0.0
    %504 = vmatprep.subr.mxu0 0.0
    %505 = vmatpush2.msra.mxu0 0.0
    %506 = vmatprep.subr.mxu0 0.0
    %507 = vmatpush2.msra.mxu0 0.0
    %508 = vmatprep.subr.mxu0 0.0
    %509 = vmatpush2.msra.mxu0 0.0
    %510 = vmatprep.mubr.f32.mxu0 0.0
    %v511 = vand.u32 %v65, 4294901760
    %512 = vmatmul.mubr.f32.gmra.mxu0 %v511
    %v513 = vpop.f32.mrf.mxu0
    %v514 = vadd.f32 %v422, %v513
    %v515 = vpop.f32.mrf.mxu0
    %516 = vdwg.mxu0
    %517 = vmatprep.subr.mxu0 0.0
    %518 = vmatpush1.msra.mxu0 0.0
    %519 = vmatprep.subr.mxu0 0.0
    %520 = vmatpush1.msra.mxu0 0.0
    %521 = vmatprep.subr.mxu0 0.0
    %522 = vmatpush1.msra.mxu0 0.0
    %523 = vmatprep.subr.mxu0 0.0
    %524 = vmatpush1.msra.mxu0 0.0
    %525 = vmatprep.subr.mxu0 0.0
    %526 = vmatpush1.msra.mxu0 0.0
    %527 = vmatprep.subr.mxu0 0.0
    %528 = vmatpush1.msra.mxu0 0.0
    %529 = vmatprep.subr.mxu0 0.0
    %530 = vmatpush1.msra.mxu0 0.0
    %531 = vmatprep.subr.mxu0 0.0
    %532 = vmatpush1.msra.mxu0 0.0
    %533 = vmatprep.subr.mxu0 0.0
    %534 = vmatpush1.msra.mxu0 0.0
    %535 = vmatprep.subr.mxu0 0.0
    %v536 = vand.u32 %v69, 4294901760
    %537 = vmatpush1.msra.mxu0 %v536
    %538 = vmatprep.subr.mxu0 0.0
    %v539 = vand.u32 %v61, 4294901760
    %540 = vmatpush1.msra.mxu0 %v539
    %541 = vmatprep.subr.mxu0 0.0
    %v542 = vand.u32 %v60, 4294901760
    %543 = vmatpush1.msra.mxu0 %v542
    %544 = vmatprep.subr.mxu0 0.0
    %v545 = vand.u32 %v59, 4294901760
    %546 = vmatpush1.msra.mxu0 %v545
    %547 = vmatprep.subr.mxu0 0.0
    %v548 = vand.u32 %v58, 4294901760
    %549 = vmatpush1.msra.mxu0 %v548
    %550 = vmatprep.subr.mxu0 0.0
    %v551 = vand.u32 %v57, 4294901760
    %552 = vmatpush1.msra.mxu0 %v551
    %553 = vmatprep.subr.mxu0 0.0
    %v554 = vand.u32 %v56, 4294901760
    %555 = vmatpush1.msra.mxu0 %v554
    %556 = vmatprep.subr.mxu0 0.0
    %557 = vmatpush2.msra.mxu0 0.0
    %558 = vmatprep.subr.mxu0 0.0
    %559 = vmatpush2.msra.mxu0 0.0
    %560 = vmatprep.subr.mxu0 0.0
    %561 = vmatpush2.msra.mxu0 0.0
    %562 = vmatprep.subr.mxu0 0.0
    %563 = vmatpush2.msra.mxu0 0.0
    %564 = vmatprep.subr.mxu0 0.0
    %565 = vmatpush2.msra.mxu0 0.0
    %566 = vmatprep.subr.mxu0 0.0
    %567 = vmatpush2.msra.mxu0 0.0
    %568 = vmatprep.subr.mxu0 0.0
    %569 = vmatpush2.msra.mxu0 0.0
    %570 = vmatprep.subr.mxu0 0.0
    %571 = vmatpush2.msra.mxu0 0.0
    %572 = vmatprep.subr.mxu0 0.0
    %573 = vmatpush2.msra.mxu0 0.0
    %574 = vmatprep.subr.mxu0 0.0
    %575 = vmatpush2.msra.mxu0 0.0
    %576 = vmatprep.subr.mxu0 0.0
    %577 = vmatpush2.msra.mxu0 0.0
    %578 = vmatprep.subr.mxu0 0.0
    %579 = vmatpush2.msra.mxu0 0.0
    %580 = vmatprep.subr.mxu0 0.0
    %581 = vmatpush2.msra.mxu0 0.0
    %582 = vmatprep.subr.mxu0 0.0
    %583 = vmatpush2.msra.mxu0 0.0
    %584 = vmatprep.subr.mxu0 0.0
    %585 = vmatpush2.msra.mxu0 0.0
    %586 = vmatprep.subr.mxu0 0.0
    %587 = vmatpush2.msra.mxu0 0.0
    %588 = vmatprep.mubr.f32.mxu0 0.0
    %v589 = vand.u32 %v65, 4294901760
    %590 = vmatmul.mubr.f32.gmra.mxu0 %v589
    %v591 = vpop.f32.mrf.mxu0
    %v592 = vadd.f32 %v514, %v591
    %v593 = vpop.f32.mrf.mxu0
    %594 = vdwg.mxu0
    %v595 = vmax.f32 %v592, 0.0
    %vm596 = vcmask 261120
    %597 = vst.msk [vmem:[#allocation3] sm:$0xff] %vm596, %v595
    %v598 = vld [vmem:[#allocation3] sm:$0xff]
    %v599 = vld [vmem:[%s3] sm:$0xff]
    %v600 = vld [vmem:[%s3 + $0x8] sm:$0xff]
    %v601 = vld [vmem:[%s3 + $0x10] sm:$0xff]
    %v602 = vld [vmem:[%s3 + $0x18] sm:$0xff]
    %v603 = vld [vmem:[%s3 + $0x20] sm:$0x1]
    %vm604 = vcmask 269312
    %v606 = vsel %vm604, %v598, 0
    %v609 = vsel %vm67, %v603, 0
    %611 = vmatprep.subr.mxu0 0.0
    %612 = vmatpush1.msra.mxu0 0.0
    %613 = vmatprep.subr.mxu0 0.0
    %614 = vmatpush1.msra.mxu0 0.0
    %615 = vmatprep.subr.mxu0 0.0
    %616 = vmatpush1.msra.mxu0 0.0
    %617 = vmatprep.subr.mxu0 0.0
    %618 = vmatpush1.msra.mxu0 0.0
    %619 = vmatprep.subr.mxu0 0.0
    %620 = vmatpush1.msra.mxu0 0.0
    %621 = vmatprep.subr.mxu0 0.0
    %622 = vmatpush1.msra.mxu0 0.0
    %623 = vmatprep.subr.mxu0 0.0
    %624 = vmatpush1.msra.mxu0 0.0
    %625 = vmatprep.subr.mxu0 0.0
    %626 = vmatpush1.msra.mxu0 0.0
    %627 = vmatprep.subr.mxu0 0.0
    %628 = vmatpush1.msra.mxu0 0.0
    %629 = vmatprep.subr.mxu0 0.0
    %630 = vmatpush1.msra.mxu0 0.0
    %631 = vmatprep.subr.mxu0 0.0
    %632 = vmatpush1.msra.mxu0 0.0
    %633 = vmatprep.subr.mxu0 0.0
    %v634 = vand.u32 %v609, 4294901760
    %635 = vmatpush1.msra.mxu0 %v634
    %636 = vmatprep.subr.mxu0 0.0
    %v637 = vand.u32 %v602, 4294901760
    %638 = vmatpush1.msra.mxu0 %v637
    %639 = vmatprep.subr.mxu0 0.0
    %v640 = vand.u32 %v601, 4294901760
    %641 = vmatpush1.msra.mxu0 %v640
    %642 = vmatprep.subr.mxu0 0.0
    %v643 = vand.u32 %v600, 4294901760
    %644 = vmatpush1.msra.mxu0 %v643
    %645 = vmatprep.subr.mxu0 0.0
    %v646 = vand.u32 %v599, 4294901760
    %647 = vmatpush1.msra.mxu0 %v646
    %648 = vmatprep.subr.mxu0 0.0
    %649 = vmatpush2.msra.mxu0 0.0
    %650 = vmatprep.subr.mxu0 0.0
    %651 = vmatpush2.msra.mxu0 0.0
    %652 = vmatprep.subr.mxu0 0.0
    %653 = vmatpush2.msra.mxu0 0.0
    %654 = vmatprep.subr.mxu0 0.0
    %655 = vmatpush2.msra.mxu0 0.0
    %656 = vmatprep.subr.mxu0 0.0
    %657 = vmatpush2.msra.mxu0 0.0
    %658 = vmatprep.subr.mxu0 0.0
    %659 = vmatpush2.msra.mxu0 0.0
    %660 = vmatprep.subr.mxu0 0.0
    %661 = vmatpush2.msra.mxu0 0.0
    %662 = vmatprep.subr.mxu0 0.0
    %663 = vmatpush2.msra.mxu0 0.0
    %664 = vmatprep.subr.mxu0 0.0
    %665 = vmatpush2.msra.mxu0 0.0
    %666 = vmatprep.subr.mxu0 0.0
    %667 = vmatpush2.msra.mxu0 0.0
    %668 = vmatprep.subr.mxu0 0.0
    %669 = vmatpush2.msra.mxu0 0.0
    %670 = vmatprep.subr.mxu0 0.0
    %671 = vmatpush2.msra.mxu0 0.0
    %672 = vmatprep.subr.mxu0 0.0
    %673 = vmatpush2.msra.mxu0 0.0
    %674 = vmatprep.subr.mxu0 0.0
    %675 = vmatpush2.msra.mxu0 0.0
    %676 = vmatprep.subr.mxu0 0.0
    %677 = vmatpush2.msra.mxu0 0.0
    %678 = vmatprep.subr.mxu0 0.0
    %679 = vmatpush2.msra.mxu0 0.0
    %680 = vmatprep.mubr.f32.mxu0 0.0
    %v681 = vand.u32 %v606, 4294901760
    %v682 = vsub.f32 %v606, %v681
    %v683 = vand.u32 %v682, 4294901760
    %v684 = vsub.f32 %v682, %v683
    %v685 = vand.u32 %v684, 4294901760
    %686 = vmatmul.mubr.f32.gmra.mxu0 %v685
    %v687 = vpop.f32.mrf.mxu0
    %v688 = vadd.f32 0.0, %v687
    %v689 = vpop.f32.mrf.mxu0
    %690 = vdwg.mxu0
    %691 = vmatprep.subr.mxu0 0.0
    %692 = vmatpush1.msra.mxu0 0.0
    %693 = vmatprep.subr.mxu0 0.0
    %694 = vmatpush1.msra.mxu0 0.0
    %695 = vmatprep.subr.mxu0 0.0
    %696 = vmatpush1.msra.mxu0 0.0
    %697 = vmatprep.subr.mxu0 0.0
    %698 = vmatpush1.msra.mxu0 0.0
    %699 = vmatprep.subr.mxu0 0.0
    %700 = vmatpush1.msra.mxu0 0.0
    %701 = vmatprep.subr.mxu0 0.0
    %702 = vmatpush1.msra.mxu0 0.0
    %703 = vmatprep.subr.mxu0 0.0
    %704 = vmatpush1.msra.mxu0 0.0
    %705 = vmatprep.subr.mxu0 0.0
    %706 = vmatpush1.msra.mxu0 0.0
    %707 = vmatprep.subr.mxu0 0.0
    %708 = vmatpush1.msra.mxu0 0.0
    %709 = vmatprep.subr.mxu0 0.0
    %710 = vmatpush1.msra.mxu0 0.0
    %711 = vmatprep.subr.mxu0 0.0
    %712 = vmatpush1.msra.mxu0 0.0
    %713 = vmatprep.subr.mxu0 0.0
    %v714 = vand.u32 %v609, 4294901760
    %v715 = vsub.f32 %v609, %v714
    %v716 = vand.u32 %v715, 4294901760
    %v717 = vsub.f32 %v715, %v716
    %v718 = vand.u32 %v717, 4294901760
    %719 = vmatpush1.msra.mxu0 %v718
    %720 = vmatprep.subr.mxu0 0.0
    %v721 = vand.u32 %v602, 4294901760
    %v722 = vsub.f32 %v602, %v721
    %v723 = vand.u32 %v722, 4294901760
    %v724 = vsub.f32 %v722, %v723
    %v725 = vand.u32 %v724, 4294901760
    %726 = vmatpush1.msra.mxu0 %v725
    %727 = vmatprep.subr.mxu0 0.0
    %v728 = vand.u32 %v601, 4294901760
    %v729 = vsub.f32 %v601, %v728
    %v730 = vand.u32 %v729, 4294901760
    %v731 = vsub.f32 %v729, %v730
    %v732 = vand.u32 %v731, 4294901760
    %733 = vmatpush1.msra.mxu0 %v732
    %734 = vmatprep.subr.mxu0 0.0
    %v735 = vand.u32 %v600, 4294901760
    %v736 = vsub.f32 %v600, %v735
    %v737 = vand.u32 %v736, 4294901760
    %v738 = vsub.f32 %v736, %v737
    %v739 = vand.u32 %v738, 4294901760
    %740 = vmatpush1.msra.mxu0 %v739
    %741 = vmatprep.subr.mxu0 0.0
    %v742 = vand.u32 %v599, 4294901760
    %v743 = vsub.f32 %v599, %v742
    %v744 = vand.u32 %v743, 4294901760
    %v745 = vsub.f32 %v743, %v744
    %v746 = vand.u32 %v745, 4294901760
    %747 = vmatpush1.msra.mxu0 %v746
    %748 = vmatprep.subr.mxu0 0.0
    %749 = vmatpush2.msra.mxu0 0.0
    %750 = vmatprep.subr.mxu0 0.0
    %751 = vmatpush2.msra.mxu0 0.0
    %752 = vmatprep.subr.mxu0 0.0
    %753 = vmatpush2.msra.mxu0 0.0
    %754 = vmatprep.subr.mxu0 0.0
    %755 = vmatpush2.msra.mxu0 0.0
    %756 = vmatprep.subr.mxu0 0.0
    %757 = vmatpush2.msra.mxu0 0.0
    %758 = vmatprep.subr.mxu0 0.0
    %759 = vmatpush2.msra.mxu0 0.0
    %760 = vmatprep.subr.mxu0 0.0
    %761 = vmatpush2.msra.mxu0 0.0
    %762 = vmatprep.subr.mxu0 0.0
    %763 = vmatpush2.msra.mxu0 0.0
    %764 = vmatprep.subr.mxu0 0.0
    %765 = vmatpush2.msra.mxu0 0.0
    %766 = vmatprep.subr.mxu0 0.0
    %767 = vmatpush2.msra.mxu0 0.0
    %768 = vmatprep.subr.mxu0 0.0
    %769 = vmatpush2.msra.mxu0 0.0
    %770 = vmatprep.subr.mxu0 0.0
    %771 = vmatpush2.msra.mxu0 0.0
    %772 = vmatprep.subr.mxu0 0.0
    %773 = vmatpush2.msra.mxu0 0.0
    %774 = vmatprep.subr.mxu0 0.0
    %775 = vmatpush2.msra.mxu0 0.0
    %776 = vmatprep.subr.mxu0 0.0
    %777 = vmatpush2.msra.mxu0 0.0
    %778 = vmatprep.subr.mxu0 0.0
    %779 = vmatpush2.msra.mxu0 0.0
    %780 = vmatprep.mubr.f32.mxu0 0.0
    %v781 = vand.u32 %v606, 4294901760
    %782 = vmatmul.mubr.f32.gmra.mxu0 %v781
    %v783 = vpop.f32.mrf.mxu0
    %v784 = vadd.f32 %v688, %v783
    %v785 = vpop.f32.mrf.mxu0
    %786 = vdwg.mxu0
    %787 = vmatprep.subr.mxu0 0.0
    %788 = vmatpush1.msra.mxu0 0.0
    %789 = vmatprep.subr.mxu0 0.0
    %790 = vmatpush1.msra.mxu0 0.0
    %791 = vmatprep.subr.mxu0 0.0
    %792 = vmatpush1.msra.mxu0 0.0
    %793 = vmatprep.subr.mxu0 0.0
    %794 = vmatpush1.msra.mxu0 0.0
    %795 = vmatprep.subr.mxu0 0.0
    %796 = vmatpush1.msra.mxu0 0.0
    %797 = vmatprep.subr.mxu0 0.0
    %798 = vmatpush1.msra.mxu0 0.0
    %799 = vmatprep.subr.mxu0 0.0
    %800 = vmatpush1.msra.mxu0 0.0
    %801 = vmatprep.subr.mxu0 0.0
    %802 = vmatpush1.msra.mxu0 0.0
    %803 = vmatprep.subr.mxu0 0.0
    %804 = vmatpush1.msra.mxu0 0.0
    %805 = vmatprep.subr.mxu0 0.0
    %806 = vmatpush1.msra.mxu0 0.0
    %807 = vmatprep.subr.mxu0 0.0
    %808 = vmatpush1.msra.mxu0 0.0
    %809 = vmatprep.subr.mxu0 0.0
    %v810 = vand.u32 %v609, 4294901760
    %v811 = vsub.f32 %v609, %v810
    %812 = vmatpush1.msra.mxu0 %v811
    %813 = vmatprep.subr.mxu0 0.0
    %v814 = vand.u32 %v602, 4294901760
    %v815 = vsub.f32 %v602, %v814
    %816 = vmatpush1.msra.mxu0 %v815
    %817 = vmatprep.subr.mxu0 0.0
    %v818 = vand.u32 %v601, 4294901760
    %v819 = vsub.f32 %v601, %v818
    %820 = vmatpush1.msra.mxu0 %v819
    %821 = vmatprep.subr.mxu0 0.0
    %v822 = vand.u32 %v600, 4294901760
    %v823 = vsub.f32 %v600, %v822
    %824 = vmatpush1.msra.mxu0 %v823
    %825 = vmatprep.subr.mxu0 0.0
    %v826 = vand.u32 %v599, 4294901760
    %v827 = vsub.f32 %v599, %v826
    %828 = vmatpush1.msra.mxu0 %v827
    %829 = vmatprep.subr.mxu0 0.0
    %830 = vmatpush2.msra.mxu0 0.0
    %831 = vmatprep.subr.mxu0 0.0
    %832 = vmatpush2.msra.mxu0 0.0
    %833 = vmatprep.subr.mxu0 0.0
    %834 = vmatpush2.msra.mxu0 0.0
    %835 = vmatprep.subr.mxu0 0.0
    %836 = vmatpush2.msra.mxu0 0.0
    %837 = vmatprep.subr.mxu0 0.0
    %838 = vmatpush2.msra.mxu0 0.0
    %839 = vmatprep.subr.mxu0 0.0
    %840 = vmatpush2.msra.mxu0 0.0
    %841 = vmatprep.subr.mxu0 0.0
    %842 = vmatpush2.msra.mxu0 0.0
    %843 = vmatprep.subr.mxu0 0.0
    %844 = vmatpush2.msra.mxu0 0.0
    %845 = vmatprep.subr.mxu0 0.0
    %846 = vmatpush2.msra.mxu0 0.0
    %847 = vmatprep.subr.mxu0 0.0
    %848 = vmatpush2.msra.mxu0 0.0
    %849 = vmatprep.subr.mxu0 0.0
    %850 = vmatpush2.msra.mxu0 0.0
    %851 = vmatprep.subr.mxu0 0.0
    %852 = vmatpush2.msra.mxu0 0.0
    %853 = vmatprep.subr.mxu0 0.0
    %854 = vmatpush2.msra.mxu0 0.0
    %855 = vmatprep.subr.mxu0 0.0
    %856 = vmatpush2.msra.mxu0 0.0
    %857 = vmatprep.subr.mxu0 0.0
    %858 = vmatpush2.msra.mxu0 0.0
    %859 = vmatprep.subr.mxu0 0.0
    %860 = vmatpush2.msra.mxu0 0.0
    %861 = vmatprep.mubr.f32.mxu0 0.0
    %v862 = vand.u32 %v606, 4294901760
    %v863 = vsub.f32 %v606, %v862
    %864 = vmatmul.mubr.f32.gmra.mxu0 %v863
    %v865 = vpop.f32.mrf.mxu0
    %v866 = vadd.f32 %v784, %v865
    %v867 = vpop.f32.mrf.mxu0
    %868 = vdwg.mxu0
    %869 = vmatprep.subr.mxu0 0.0
    %870 = vmatpush1.msra.mxu0 0.0
    %871 = vmatprep.subr.mxu0 0.0
    %872 = vmatpush1.msra.mxu0 0.0
    %873 = vmatprep.subr.mxu0 0.0
    %874 = vmatpush1.msra.mxu0 0.0
    %875 = vmatprep.subr.mxu0 0.0
    %876 = vmatpush1.msra.mxu0 0.0
    %877 = vmatprep.subr.mxu0 0.0
    %878 = vmatpush1.msra.mxu0 0.0
    %879 = vmatprep.subr.mxu0 0.0
    %880 = vmatpush1.msra.mxu0 0.0
    %881 = vmatprep.subr.mxu0 0.0
    %882 = vmatpush1.msra.mxu0 0.0
    %883 = vmatprep.subr.mxu0 0.0
    %884 = vmatpush1.msra.mxu0 0.0
    %885 = vmatprep.subr.mxu0 0.0
    %886 = vmatpush1.msra.mxu0 0.0
    %887 = vmatprep.subr.mxu0 0.0
    %888 = vmatpush1.msra.mxu0 0.0
    %889 = vmatprep.subr.mxu0 0.0
    %890 = vmatpush1.msra.mxu0 0.0
    %891 = vmatprep.subr.mxu0 0.0
    %v892 = vand.u32 %v609, 4294901760
    %893 = vmatpush1.msra.mxu0 %v892
    %894 = vmatprep.subr.mxu0 0.0
    %v895 = vand.u32 %v602, 4294901760
    %896 = vmatpush1.msra.mxu0 %v895
    %897 = vmatprep.subr.mxu0 0.0
    %v898 = vand.u32 %v601, 4294901760
    %899 = vmatpush1.msra.mxu0 %v898
    %900 = vmatprep.subr.mxu0 0.0
    %v901 = vand.u32 %v600, 4294901760
    %902 = vmatpush1.msra.mxu0 %v901
    %903 = vmatprep.subr.mxu0 0.0
    %v904 = vand.u32 %v599, 4294901760
    %905 = vmatpush1.msra.mxu0 %v904
    %906 = vmatprep.subr.mxu0 0.0
    %907 = vmatpush2.msra.mxu0 0.0
    %908 = vmatprep.subr.mxu0 0.0
    %909 = vmatpush2.msra.mxu0 0.0
    %910 = vmatprep.subr.mxu0 0.0
    %911 = vmatpush2.msra.mxu0 0.0
    %912 = vmatprep.subr.mxu0 0.0
    %913 = vmatpush2.msra.mxu0 0.0
    %914 = vmatprep.subr.mxu0 0.0
    %915 = vmatpush2.msra.mxu0 0.0
    %916 = vmatprep.subr.mxu0 0.0
    %917 = vmatpush2.msra.mxu0 0.0
    %918 = vmatprep.subr.mxu0 0.0
    %919 = vmatpush2.msra.mxu0 0.0
    %920 = vmatprep.subr.mxu0 0.0
    %921 = vmatpush2.msra.mxu0 0.0
    %922 = vmatprep.subr.mxu0 0.0
    %923 = vmatpush2.msra.mxu0 0.0
    %924 = vmatprep.subr.mxu0 0.0
    %925 = vmatpush2.msra.mxu0 0.0
    %926 = vmatprep.subr.mxu0 0.0
    %927 = vmatpush2.msra.mxu0 0.0
    %928 = vmatprep.subr.mxu0 0.0
    %929 = vmatpush2.msra.mxu0 0.0
    %930 = vmatprep.subr.mxu0 0.0
    %931 = vmatpush2.msra.mxu0 0.0
    %932 = vmatprep.subr.mxu0 0.0
    %933 = vmatpush2.msra.mxu0 0.0
    %934 = vmatprep.subr.mxu0 0.0
    %935 = vmatpush2.msra.mxu0 0.0
    %936 = vmatprep.subr.mxu0 0.0
    %937 = vmatpush2.msra.mxu0 0.0
    %938 = vmatprep.mubr.f32.mxu0 0.0
    %v939 = vand.u32 %v606, 4294901760
    %v940 = vsub.f32 %v606, %v939
    %v941 = vand.u32 %v940, 4294901760
    %942 = vmatmul.mubr.f32.gmra.mxu0 %v941
    %v943 = vpop.f32.mrf.mxu0
    %v944 = vadd.f32 %v866, %v943
    %v945 = vpop.f32.mrf.mxu0
    %946 = vdwg.mxu0
    %947 = vmatprep.subr.mxu0 0.0
    %948 = vmatpush1.msra.mxu0 0.0
    %949 = vmatprep.subr.mxu0 0.0
    %950 = vmatpush1.msra.mxu0 0.0
    %951 = vmatprep.subr.mxu0 0.0
    %952 = vmatpush1.msra.mxu0 0.0
    %953 = vmatprep.subr.mxu0 0.0
    %954 = vmatpush1.msra.mxu0 0.0
    %955 = vmatprep.subr.mxu0 0.0
    %956 = vmatpush1.msra.mxu0 0.0
    %957 = vmatprep.subr.mxu0 0.0
    %958 = vmatpush1.msra.mxu0 0.0
    %959 = vmatprep.subr.mxu0 0.0
    %960 = vmatpush1.msra.mxu0 0.0
    %961 = vmatprep.subr.mxu0 0.0
    %962 = vmatpush1.msra.mxu0 0.0
    %963 = vmatprep.subr.mxu0 0.0
    %964 = vmatpush1.msra.mxu0 0.0
    %965 = vmatprep.subr.mxu0 0.0
    %966 = vmatpush1.msra.mxu0 0.0
    %967 = vmatprep.subr.mxu0 0.0
    %968 = vmatpush1.msra.mxu0 0.0
    %969 = vmatprep.subr.mxu0 0.0
    %v970 = vand.u32 %v609, 4294901760
    %v971 = vsub.f32 %v609, %v970
    %v972 = vand.u32 %v971, 4294901760
    %973 = vmatpush1.msra.mxu0 %v972
    %974 = vmatprep.subr.mxu0 0.0
    %v975 = vand.u32 %v602, 4294901760
    %v976 = vsub.f32 %v602, %v975
    %v977 = vand.u32 %v976, 4294901760
    %978 = vmatpush1.msra.mxu0 %v977
    %979 = vmatprep.subr.mxu0 0.0
    %v980 = vand.u32 %v601, 4294901760
    %v981 = vsub.f32 %v601, %v980
    %v982 = vand.u32 %v981, 4294901760
    %983 = vmatpush1.msra.mxu0 %v982
    %984 = vmatprep.subr.mxu0 0.0
    %v985 = vand.u32 %v600, 4294901760
    %v986 = vsub.f32 %v600, %v985
    %v987 = vand.u32 %v986, 4294901760
    %988 = vmatpush1.msra.mxu0 %v987
    %989 = vmatprep.subr.mxu0 0.0
    %v990 = vand.u32 %v599, 4294901760
    %v991 = vsub.f32 %v599, %v990
    %v992 = vand.u32 %v991, 4294901760
    %993 = vmatpush1.msra.mxu0 %v992
    %994 = vmatprep.subr.mxu0 0.0
    %995 = vmatpush2.msra.mxu0 0.0
    %996 = vmatprep.subr.mxu0 0.0
    %997 = vmatpush2.msra.mxu0 0.0
    %998 = vmatprep.subr.mxu0 0.0
    %999 = vmatpush2.msra.mxu0 0.0
    %1000 = vmatprep.subr.mxu0 0.0
    %1001 = vmatpush2.msra.mxu0 0.0
    %1002 = vmatprep.subr.mxu0 0.0
    %1003 = vmatpush2.msra.mxu0 0.0
    %1004 = vmatprep.subr.mxu0 0.0
    %1005 = vmatpush2.msra.mxu0 0.0
    %1006 = vmatprep.subr.mxu0 0.0
    %1007 = vmatpush2.msra.mxu0 0.0
    %1008 = vmatprep.subr.mxu0 0.0
    %1009 = vmatpush2.msra.mxu0 0.0
    %1010 = vmatprep.subr.mxu0 0.0
    %1011 = vmatpush2.msra.mxu0 0.0
    %1012 = vmatprep.subr.mxu0 0.0
    %1013 = vmatpush2.msra.mxu0 0.0
    %1014 = vmatprep.subr.mxu0 0.0
    %1015 = vmatpush2.msra.mxu0 0.0
    %1016 = vmatprep.subr.mxu0 0.0
    %1017 = vmatpush2.msra.mxu0 0.0
    %1018 = vmatprep.subr.mxu0 0.0
    %1019 = vmatpush2.msra.mxu0 0.0
    %1020 = vmatprep.subr.mxu0 0.0
    %1021 = vmatpush2.msra.mxu0 0.0
    %1022 = vmatprep.subr.mxu0 0.0
    %1023 = vmatpush2.msra.mxu0 0.0
    %1024 = vmatprep.subr.mxu0 0.0
    %1025 = vmatpush2.msra.mxu0 0.0
    %1026 = vmatprep.mubr.f32.mxu0 0.0
    %v1027 = vand.u32 %v606, 4294901760
    %1028 = vmatmul.mubr.f32.gmra.mxu0 %v1027
    %v1029 = vpop.f32.mrf.mxu0
    %v1030 = vadd.f32 %v944, %v1029
    %v1031 = vpop.f32.mrf.mxu0
    %1032 = vdwg.mxu0
    %1033 = vmatprep.subr.mxu0 0.0
    %1034 = vmatpush1.msra.mxu0 0.0
    %1035 = vmatprep.subr.mxu0 0.0
    %1036 = vmatpush1.msra.mxu0 0.0
    %1037 = vmatprep.subr.mxu0 0.0
    %1038 = vmatpush1.msra.mxu0 0.0
    %1039 = vmatprep.subr.mxu0 0.0
    %1040 = vmatpush1.msra.mxu0 0.0
    %1041 = vmatprep.subr.mxu0 0.0
    %1042 = vmatpush1.msra.mxu0 0.0
    %1043 = vmatprep.subr.mxu0 0.0
    %1044 = vmatpush1.msra.mxu0 0.0
    %1045 = vmatprep.subr.mxu0 0.0
    %1046 = vmatpush1.msra.mxu0 0.0
    %1047 = vmatprep.subr.mxu0 0.0
    %1048 = vmatpush1.msra.mxu0 0.0
    %1049 = vmatprep.subr.mxu0 0.0
    %1050 = vmatpush1.msra.mxu0 0.0
    %1051 = vmatprep.subr.mxu0 0.0
    %1052 = vmatpush1.msra.mxu0 0.0
    %1053 = vmatprep.subr.mxu0 0.0
    %1054 = vmatpush1.msra.mxu0 0.0
    %1055 = vmatprep.subr.mxu0 0.0
    %v1056 = vand.u32 %v609, 4294901760
    %1057 = vmatpush1.msra.mxu0 %v1056
    %1058 = vmatprep.subr.mxu0 0.0
    %v1059 = vand.u32 %v602, 4294901760
    %1060 = vmatpush1.msra.mxu0 %v1059
    %1061 = vmatprep.subr.mxu0 0.0
    %v1062 = vand.u32 %v601, 4294901760
    %1063 = vmatpush1.msra.mxu0 %v1062
    %1064 = vmatprep.subr.mxu0 0.0
    %v1065 = vand.u32 %v600, 4294901760
    %1066 = vmatpush1.msra.mxu0 %v1065
    %1067 = vmatprep.subr.mxu0 0.0
    %v1068 = vand.u32 %v599, 4294901760
    %1069 = vmatpush1.msra.mxu0 %v1068
    %1070 = vmatprep.subr.mxu0 0.0
    %1071 = vmatpush2.msra.mxu0 0.0
    %1072 = vmatprep.subr.mxu0 0.0
    %1073 = vmatpush2.msra.mxu0 0.0
    %1074 = vmatprep.subr.mxu0 0.0
    %1075 = vmatpush2.msra.mxu0 0.0
    %1076 = vmatprep.subr.mxu0 0.0
    %1077 = vmatpush2.msra.mxu0 0.0
    %1078 = vmatprep.subr.mxu0 0.0
    %1079 = vmatpush2.msra.mxu0 0.0
    %1080 = vmatprep.subr.mxu0 0.0
    %1081 = vmatpush2.msra.mxu0 0.0
    %1082 = vmatprep.subr.mxu0 0.0
    %1083 = vmatpush2.msra.mxu0 0.0
    %1084 = vmatprep.subr.mxu0 0.0
    %1085 = vmatpush2.msra.mxu0 0.0
    %1086 = vmatprep.subr.mxu0 0.0
    %1087 = vmatpush2.msra.mxu0 0.0
    %1088 = vmatprep.subr.mxu0 0.0
    %1089 = vmatpush2.msra.mxu0 0.0
    %1090 = vmatprep.subr.mxu0 0.0
    %1091 = vmatpush2.msra.mxu0 0.0
    %1092 = vmatprep.subr.mxu0 0.0
    %1093 = vmatpush2.msra.mxu0 0.0
    %1094 = vmatprep.subr.mxu0 0.0
    %1095 = vmatpush2.msra.mxu0 0.0
    %1096 = vmatprep.subr.mxu0 0.0
    %1097 = vmatpush2.msra.mxu0 0.0
    %1098 = vmatprep.subr.mxu0 0.0
    %1099 = vmatpush2.msra.mxu0 0.0
    %1100 = vmatprep.subr.mxu0 0.0
    %1101 = vmatpush2.msra.mxu0 0.0
    %1102 = vmatprep.mubr.f32.mxu0 0.0
    %v1103 = vand.u32 %v606, 4294901760
    %1104 = vmatmul.mubr.f32.gmra.mxu0 %v1103
    %v1105 = vpop.f32.mrf.mxu0
    %v1106 = vadd.f32 %v1030, %v1105
    %v1107 = vpop.f32.mrf.mxu0
    %1108 = vdwg.mxu0
    %1110 = vrot.lane.b32.xlu0 %v592, 96
    %v1111 = vpop.permute.xlu0 %1110
    %v1113 = vadd.f32 %v1106, %v1111
    %v1114 = vxor.u32 %v1113, 2147483648
    %v1115 = vmul.f32 %v1114, 1.442695
    %v1116 = vpow.pop %v1115
    %v1117 = vadd.f32 %v1116, 1.0
    %v1118 = vrcp.pop %v1117
    %v1119 = vmul.f32 1.0, %v1118
    %1120 = vrot.lane.b32.xlu0 %v592, 32
    %v1121 = vpop.permute.xlu0 %1120
    %v1123 = vmul.f32 %v1119, %v1121
    %1125 = vrot.lane.b32.xlu0 %v1123, 64
    %v1126 = vpop.permute.xlu0 %1125
    %v1128 = vadd.f32 %v1106, %v1126
    %v1129 = vtanh.pop %v1128
    %v1130 = vsub.f32 1.0, %v1119
    %1132 = vrot.lane.b32.xlu0 %v1129, 96
    %v1133 = vpop.permute.xlu0 %1132
    %v1135 = vmul.f32 %v1130, %v1133
    %1136 = vrot.lane.b32.xlu0 %v55, 32
    %v1137 = vpop.permute.xlu0 %1136
    %v1139 = vmul.f32 %v1119, %v1137
    %v1140 = vadd.f32 %v1135, %v1139
    %1142 = vrot.lane.b32.xlu0 %v1140, 96
    %v1143 = vpop.permute.xlu0 %1142
    %1145 = vst.msk [vmem:[#allocation2] sm:$0xff] %vm596, %v1143
    %1146 = vst.msk [vmem:[#allocation3] sm:$0xff] %vm596, %v1143
    %v1147 = vld [vmem:[#allocation3] sm:$0xff]
    %v1148 = vld [vmem:[%s4] sm:$0xff]
    %v1149 = vld [vmem:[%s4 + $0x8] sm:$0xff]
    %v1150 = vld [vmem:[%s4 + $0x10] sm:$0xff]
    %v1151 = vld [vmem:[%s4 + $0x18] sm:$0xff]
    %v1152 = vld [vmem:[%s4 + $0x20] sm:$0x1]
    %v1154 = vsel %vm604, %v1147, 0
    %v1157 = vsel %vm67, %v1152, 0
    %1159 = vmatprep.subr.mxu0 0.0
    %1160 = vmatpush1.msra.mxu0 0.0
    %1161 = vmatprep.subr.mxu0 0.0
    %1162 = vmatpush1.msra.mxu0 0.0
    %1163 = vmatprep.subr.mxu0 0.0
    %1164 = vmatpush1.msra.mxu0 0.0
    %1165 = vmatprep.subr.mxu0 0.0
    %1166 = vmatpush1.msra.mxu0 0.0
    %1167 = vmatprep.subr.mxu0 0.0
    %1168 = vmatpush1.msra.mxu0 0.0
    %1169 = vmatprep.subr.mxu0 0.0
    %1170 = vmatpush1.msra.mxu0 0.0
    %1171 = vmatprep.subr.mxu0 0.0
    %1172 = vmatpush1.msra.mxu0 0.0
    %1173 = vmatprep.subr.mxu0 0.0
    %1174 = vmatpush1.msra.mxu0 0.0
    %1175 = vmatprep.subr.mxu0 0.0
    %1176 = vmatpush1.msra.mxu0 0.0
    %1177 = vmatprep.subr.mxu0 0.0
    %1178 = vmatpush1.msra.mxu0 0.0
    %1179 = vmatprep.subr.mxu0 0.0
    %1180 = vmatpush1.msra.mxu0 0.0
    %1181 = vmatprep.subr.mxu0 0.0
    %v1182 = vand.u32 %v1157, 4294901760
    %1183 = vmatpush1.msra.mxu0 %v1182
    %1184 = vmatprep.subr.mxu0 0.0
    %v1185 = vand.u32 %v1151, 4294901760
    %1186 = vmatpush1.msra.mxu0 %v1185
    %1187 = vmatprep.subr.mxu0 0.0
    %v1188 = vand.u32 %v1150, 4294901760
    %1189 = vmatpush1.msra.mxu0 %v1188
    %1190 = vmatprep.subr.mxu0 0.0
    %v1191 = vand.u32 %v1149, 4294901760
    %1192 = vmatpush1.msra.mxu0 %v1191
    %1193 = vmatprep.subr.mxu0 0.0
    %v1194 = vand.u32 %v1148, 4294901760
    %1195 = vmatpush1.msra.mxu0 %v1194
    %1196 = vmatprep.subr.mxu0 0.0
    %1197 = vmatpush2.msra.mxu0 0.0
    %1198 = vmatprep.subr.mxu0 0.0
    %1199 = vmatpush2.msra.mxu0 0.0
    %1200 = vmatprep.subr.mxu0 0.0
    %1201 = vmatpush2.msra.mxu0 0.0
    %1202 = vmatprep.subr.mxu0 0.0
    %1203 = vmatpush2.msra.mxu0 0.0
    %1204 = vmatprep.subr.mxu0 0.0
    %1205 = vmatpush2.msra.mxu0 0.0
    %1206 = vmatprep.subr.mxu0 0.0
    %1207 = vmatpush2.msra.mxu0 0.0
    %1208 = vmatprep.subr.mxu0 0.0
    %1209 = vmatpush2.msra.mxu0 0.0
    %1210 = vmatprep.subr.mxu0 0.0
    %1211 = vmatpush2.msra.mxu0 0.0
    %1212 = vmatprep.subr.mxu0 0.0
    %1213 = vmatpush2.msra.mxu0 0.0
    %1214 = vmatprep.subr.mxu0 0.0
    %1215 = vmatpush2.msra.mxu0 0.0
    %1216 = vmatprep.subr.mxu0 0.0
    %1217 = vmatpush2.msra.mxu0 0.0
    %1218 = vmatprep.subr.mxu0 0.0
    %1219 = vmatpush2.msra.mxu0 0.0
    %1220 = vmatprep.subr.mxu0 0.0
    %1221 = vmatpush2.msra.mxu0 0.0
    %1222 = vmatprep.subr.mxu0 0.0
    %1223 = vmatpush2.msra.mxu0 0.0
    %1224 = vmatprep.subr.mxu0 0.0
    %1225 = vmatpush2.msra.mxu0 0.0
    %1226 = vmatprep.subr.mxu0 0.0
    %1227 = vmatpush2.msra.mxu0 0.0
    %1228 = vmatprep.mubr.f32.mxu0 0.0
    %v1229 = vand.u32 %v1154, 4294901760
    %v1230 = vsub.f32 %v1154, %v1229
    %v1231 = vand.u32 %v1230, 4294901760
    %v1232 = vsub.f32 %v1230, %v1231
    %v1233 = vand.u32 %v1232, 4294901760
    %1234 = vmatmul.mubr.f32.gmra.mxu0 %v1233
    %v1235 = vpop.f32.mrf.mxu0
    %v1236 = vadd.f32 0.0, %v1235
    %v1237 = vpop.f32.mrf.mxu0
    %1238 = vdwg.mxu0
    %1239 = vmatprep.subr.mxu0 0.0
    %1240 = vmatpush1.msra.mxu0 0.0
    %1241 = vmatprep.subr.mxu0 0.0
    %1242 = vmatpush1.msra.mxu0 0.0
    %1243 = vmatprep.subr.mxu0 0.0
    %1244 = vmatpush1.msra.mxu0 0.0
    %1245 = vmatprep.subr.mxu0 0.0
    %1246 = vmatpush1.msra.mxu0 0.0
    %1247 = vmatprep.subr.mxu0 0.0
    %1248 = vmatpush1.msra.mxu0 0.0
    %1249 = vmatprep.subr.mxu0 0.0
    %1250 = vmatpush1.msra.mxu0 0.0
    %1251 = vmatprep.subr.mxu0 0.0
    %1252 = vmatpush1.msra.mxu0 0.0
    %1253 = vmatprep.subr.mxu0 0.0
    %1254 = vmatpush1.msra.mxu0 0.0
    %1255 = vmatprep.subr.mxu0 0.0
    %1256 = vmatpush1.msra.mxu0 0.0
    %1257 = vmatprep.subr.mxu0 0.0
    %1258 = vmatpush1.msra.mxu0 0.0
    %1259 = vmatprep.subr.mxu0 0.0
    %1260 = vmatpush1.msra.mxu0 0.0
    %1261 = vmatprep.subr.mxu0 0.0
    %v1262 = vand.u32 %v1157, 4294901760
    %v1263 = vsub.f32 %v1157, %v1262
    %v1264 = vand.u32 %v1263, 4294901760
    %v1265 = vsub.f32 %v1263, %v1264
    %v1266 = vand.u32 %v1265, 4294901760
    %1267 = vmatpush1.msra.mxu0 %v1266
    %1268 = vmatprep.subr.mxu0 0.0
    %v1269 = vand.u32 %v1151, 4294901760
    %v1270 = vsub.f32 %v1151, %v1269
    %v1271 = vand.u32 %v1270, 4294901760
    %v1272 = vsub.f32 %v1270, %v1271
    %v1273 = vand.u32 %v1272, 4294901760
    %1274 = vmatpush1.msra.mxu0 %v1273
    %1275 = vmatprep.subr.mxu0 0.0
    %v1276 = vand.u32 %v1150, 4294901760
    %v1277 = vsub.f32 %v1150, %v1276
    %v1278 = vand.u32 %v1277, 4294901760
    %v1279 = vsub.f32 %v1277, %v1278
    %v1280 = vand.u32 %v1279, 4294901760
    %1281 = vmatpush1.msra.mxu0 %v1280
    %1282 = vmatprep.subr.mxu0 0.0
    %v1283 = vand.u32 %v1149, 4294901760
    %v1284 = vsub.f32 %v1149, %v1283
    %v1285 = vand.u32 %v1284, 4294901760
    %v1286 = vsub.f32 %v1284, %v1285
    %v1287 = vand.u32 %v1286, 4294901760
    %1288 = vmatpush1.msra.mxu0 %v1287
    %1289 = vmatprep.subr.mxu0 0.0
    %v1290 = vand.u32 %v1148, 4294901760
    %v1291 = vsub.f32 %v1148, %v1290
    %v1292 = vand.u32 %v1291, 4294901760
    %v1293 = vsub.f32 %v1291, %v1292
    %v1294 = vand.u32 %v1293, 4294901760
    %1295 = vmatpush1.msra.mxu0 %v1294
    %1296 = vmatprep.subr.mxu0 0.0
    %1297 = vmatpush2.msra.mxu0 0.0
    %1298 = vmatprep.subr.mxu0 0.0
    %1299 = vmatpush2.msra.mxu0 0.0
    %1300 = vmatprep.subr.mxu0 0.0
    %1301 = vmatpush2.msra.mxu0 0.0
    %1302 = vmatprep.subr.mxu0 0.0
    %1303 = vmatpush2.msra.mxu0 0.0
    %1304 = vmatprep.subr.mxu0 0.0
    %1305 = vmatpush2.msra.mxu0 0.0
    %1306 = vmatprep.subr.mxu0 0.0
    %1307 = vmatpush2.msra.mxu0 0.0
    %1308 = vmatprep.subr.mxu0 0.0
    %1309 = vmatpush2.msra.mxu0 0.0
    %1310 = vmatprep.subr.mxu0 0.0
    %1311 = vmatpush2.msra.mxu0 0.0
    %1312 = vmatprep.subr.mxu0 0.0
    %1313 = vmatpush2.msra.mxu0 0.0
    %1314 = vmatprep.subr.mxu0 0.0
    %1315 = vmatpush2.msra.mxu0 0.0
    %1316 = vmatprep.subr.mxu0 0.0
    %1317 = vmatpush2.msra.mxu0 0.0
    %1318 = vmatprep.subr.mxu0 0.0
    %1319 = vmatpush2.msra.mxu0 0.0
    %1320 = vmatprep.subr.mxu0 0.0
    %1321 = vmatpush2.msra.mxu0 0.0
    %1322 = vmatprep.subr.mxu0 0.0
    %1323 = vmatpush2.msra.mxu0 0.0
    %1324 = vmatprep.subr.mxu0 0.0
    %1325 = vmatpush2.msra.mxu0 0.0
    %1326 = vmatprep.subr.mxu0 0.0
    %1327 = vmatpush2.msra.mxu0 0.0
    %1328 = vmatprep.mubr.f32.mxu0 0.0
    %v1329 = vand.u32 %v1154, 4294901760
    %1330 = vmatmul.mubr.f32.gmra.mxu0 %v1329
    %v1331 = vpop.f32.mrf.mxu0
    %v1332 = vadd.f32 %v1236, %v1331
    %v1333 = vpop.f32.mrf.mxu0
    %1334 = vdwg.mxu0
    %1335 = vmatprep.subr.mxu0 0.0
    %1336 = vmatpush1.msra.mxu0 0.0
    %1337 = vmatprep.subr.mxu0 0.0
    %1338 = vmatpush1.msra.mxu0 0.0
    %1339 = vmatprep.subr.mxu0 0.0
    %1340 = vmatpush1.msra.mxu0 0.0
    %1341 = vmatprep.subr.mxu0 0.0
    %1342 = vmatpush1.msra.mxu0 0.0
    %1343 = vmatprep.subr.mxu0 0.0
    %1344 = vmatpush1.msra.mxu0 0.0
    %1345 = vmatprep.subr.mxu0 0.0
    %1346 = vmatpush1.msra.mxu0 0.0
    %1347 = vmatprep.subr.mxu0 0.0
    %1348 = vmatpush1.msra.mxu0 0.0
    %1349 = vmatprep.subr.mxu0 0.0
    %1350 = vmatpush1.msra.mxu0 0.0
    %1351 = vmatprep.subr.mxu0 0.0
    %1352 = vmatpush1.msra.mxu0 0.0
    %1353 = vmatprep.subr.mxu0 0.0
    %1354 = vmatpush1.msra.mxu0 0.0
    %1355 = vmatprep.subr.mxu0 0.0
    %1356 = vmatpush1.msra.mxu0 0.0
    %1357 = vmatprep.subr.mxu0 0.0
    %v1358 = vand.u32 %v1157, 4294901760
    %v1359 = vsub.f32 %v1157, %v1358
    %1360 = vmatpush1.msra.mxu0 %v1359
    %1361 = vmatprep.subr.mxu0 0.0
    %v1362 = vand.u32 %v1151, 4294901760
    %v1363 = vsub.f32 %v1151, %v1362
    %1364 = vmatpush1.msra.mxu0 %v1363
    %1365 = vmatprep.subr.mxu0 0.0
    %v1366 = vand.u32 %v1150, 4294901760
    %v1367 = vsub.f32 %v1150, %v1366
    %1368 = vmatpush1.msra.mxu0 %v1367
    %1369 = vmatprep.subr.mxu0 0.0
    %v1370 = vand.u32 %v1149, 4294901760
    %v1371 = vsub.f32 %v1149, %v1370
    %1372 = vmatpush1.msra.mxu0 %v1371
    %1373 = vmatprep.subr.mxu0 0.0
    %v1374 = vand.u32 %v1148, 4294901760
    %v1375 = vsub.f32 %v1148, %v1374
    %1376 = vmatpush1.msra.mxu0 %v1375
    %1377 = vmatprep.subr.mxu0 0.0
    %1378 = vmatpush2.msra.mxu0 0.0
    %1379 = vmatprep.subr.mxu0 0.0
    %1380 = vmatpush2.msra.mxu0 0.0
    %1381 = vmatprep.subr.mxu0 0.0
    %1382 = vmatpush2.msra.mxu0 0.0
    %1383 = vmatprep.subr.mxu0 0.0
    %1384 = vmatpush2.msra.mxu0 0.0
    %1385 = vmatprep.subr.mxu0 0.0
    %1386 = vmatpush2.msra.mxu0 0.0
    %1387 = vmatprep.subr.mxu0 0.0
    %1388 = vmatpush2.msra.mxu0 0.0
    %1389 = vmatprep.subr.mxu0 0.0
    %1390 = vmatpush2.msra.mxu0 0.0
    %1391 = vmatprep.subr.mxu0 0.0
    %1392 = vmatpush2.msra.mxu0 0.0
    %1393 = vmatprep.subr.mxu0 0.0
    %1394 = vmatpush2.msra.mxu0 0.0
    %1395 = vmatprep.subr.mxu0 0.0
    %1396 = vmatpush2.msra.mxu0 0.0
    %1397 = vmatprep.subr.mxu0 0.0
    %1398 = vmatpush2.msra.mxu0 0.0
    %1399 = vmatprep.subr.mxu0 0.0
    %1400 = vmatpush2.msra.mxu0 0.0
    %1401 = vmatprep.subr.mxu0 0.0
    %1402 = vmatpush2.msra.mxu0 0.0
    %1403 = vmatprep.subr.mxu0 0.0
    %1404 = vmatpush2.msra.mxu0 0.0
    %1405 = vmatprep.subr.mxu0 0.0
    %1406 = vmatpush2.msra.mxu0 0.0
    %1407 = vmatprep.subr.mxu0 0.0
    %1408 = vmatpush2.msra.mxu0 0.0
    %1409 = vmatprep.mubr.f32.mxu0 0.0
    %v1410 = vand.u32 %v1154, 4294901760
    %v1411 = vsub.f32 %v1154, %v1410
    %1412 = vmatmul.mubr.f32.gmra.mxu0 %v1411
    %v1413 = vpop.f32.mrf.mxu0
    %v1414 = vadd.f32 %v1332, %v1413
    %v1415 = vpop.f32.mrf.mxu0
    %1416 = vdwg.mxu0
    %1417 = vmatprep.subr.mxu0 0.0
    %1418 = vmatpush1.msra.mxu0 0.0
    %1419 = vmatprep.subr.mxu0 0.0
    %1420 = vmatpush1.msra.mxu0 0.0
    %1421 = vmatprep.subr.mxu0 0.0
    %1422 = vmatpush1.msra.mxu0 0.0
    %1423 = vmatprep.subr.mxu0 0.0
    %1424 = vmatpush1.msra.mxu0 0.0
    %1425 = vmatprep.subr.mxu0 0.0
    %1426 = vmatpush1.msra.mxu0 0.0
    %1427 = vmatprep.subr.mxu0 0.0
    %1428 = vmatpush1.msra.mxu0 0.0
    %1429 = vmatprep.subr.mxu0 0.0
    %1430 = vmatpush1.msra.mxu0 0.0
    %1431 = vmatprep.subr.mxu0 0.0
    %1432 = vmatpush1.msra.mxu0 0.0
    %1433 = vmatprep.subr.mxu0 0.0
    %1434 = vmatpush1.msra.mxu0 0.0
    %1435 = vmatprep.subr.mxu0 0.0
    %1436 = vmatpush1.msra.mxu0 0.0
    %1437 = vmatprep.subr.mxu0 0.0
    %1438 = vmatpush1.msra.mxu0 0.0
    %1439 = vmatprep.subr.mxu0 0.0
    %v1440 = vand.u32 %v1157, 4294901760
    %1441 = vmatpush1.msra.mxu0 %v1440
    %1442 = vmatprep.subr.mxu0 0.0
    %v1443 = vand.u32 %v1151, 4294901760
    %1444 = vmatpush1.msra.mxu0 %v1443
    %1445 = vmatprep.subr.mxu0 0.0
    %v1446 = vand.u32 %v1150, 4294901760
    %1447 = vmatpush1.msra.mxu0 %v1446
    %1448 = vmatprep.subr.mxu0 0.0
    %v1449 = vand.u32 %v1149, 4294901760
    %1450 = vmatpush1.msra.mxu0 %v1449
    %1451 = vmatprep.subr.mxu0 0.0
    %v1452 = vand.u32 %v1148, 4294901760
    %1453 = vmatpush1.msra.mxu0 %v1452
    %1454 = vmatprep.subr.mxu0 0.0
    %1455 = vmatpush2.msra.mxu0 0.0
    %1456 = vmatprep.subr.mxu0 0.0
    %1457 = vmatpush2.msra.mxu0 0.0
    %1458 = vmatprep.subr.mxu0 0.0
    %1459 = vmatpush2.msra.mxu0 0.0
    %1460 = vmatprep.subr.mxu0 0.0
    %1461 = vmatpush2.msra.mxu0 0.0
    %1462 = vmatprep.subr.mxu0 0.0
    %1463 = vmatpush2.msra.mxu0 0.0
    %1464 = vmatprep.subr.mxu0 0.0
    %1465 = vmatpush2.msra.mxu0 0.0
    %1466 = vmatprep.subr.mxu0 0.0
    %1467 = vmatpush2.msra.mxu0 0.0
    %1468 = vmatprep.subr.mxu0 0.0
    %1469 = vmatpush2.msra.mxu0 0.0
    %1470 = vmatprep.subr.mxu0 0.0
    %1471 = vmatpush2.msra.mxu0 0.0
    %1472 = vmatprep.subr.mxu0 0.0
    %1473 = vmatpush2.msra.mxu0 0.0
    %1474 = vmatprep.subr.mxu0 0.0
    %1475 = vmatpush2.msra.mxu0 0.0
    %1476 = vmatprep.subr.mxu0 0.0
    %1477 = vmatpush2.msra.mxu0 0.0
    %1478 = vmatprep.subr.mxu0 0.0
    %1479 = vmatpush2.msra.mxu0 0.0
    %1480 = vmatprep.subr.mxu0 0.0
    %1481 = vmatpush2.msra.mxu0 0.0
    %1482 = vmatprep.subr.mxu0 0.0
    %1483 = vmatpush2.msra.mxu0 0.0
    %1484 = vmatprep.subr.mxu0 0.0
    %1485 = vmatpush2.msra.mxu0 0.0
    %1486 = vmatprep.mubr.f32.mxu0 0.0
    %v1487 = vand.u32 %v1154, 4294901760
    %v1488 = vsub.f32 %v1154, %v1487
    %v1489 = vand.u32 %v1488, 4294901760
    %1490 = vmatmul.mubr.f32.gmra.mxu0 %v1489
    %v1491 = vpop.f32.mrf.mxu0
    %v1492 = vadd.f32 %v1414, %v1491
    %v1493 = vpop.f32.mrf.mxu0
    %1494 = vdwg.mxu0
    %1495 = vmatprep.subr.mxu0 0.0
    %1496 = vmatpush1.msra.mxu0 0.0
    %1497 = vmatprep.subr.mxu0 0.0
    %1498 = vmatpush1.msra.mxu0 0.0
    %1499 = vmatprep.subr.mxu0 0.0
    %1500 = vmatpush1.msra.mxu0 0.0
    %1501 = vmatprep.subr.mxu0 0.0
    %1502 = vmatpush1.msra.mxu0 0.0
    %1503 = vmatprep.subr.mxu0 0.0
    %1504 = vmatpush1.msra.mxu0 0.0
    %1505 = vmatprep.subr.mxu0 0.0
    %1506 = vmatpush1.msra.mxu0 0.0
    %1507 = vmatprep.subr.mxu0 0.0
    %1508 = vmatpush1.msra.mxu0 0.0
    %1509 = vmatprep.subr.mxu0 0.0
    %1510 = vmatpush1.msra.mxu0 0.0
    %1511 = vmatprep.subr.mxu0 0.0
    %1512 = vmatpush1.msra.mxu0 0.0
    %1513 = vmatprep.subr.mxu0 0.0
    %1514 = vmatpush1.msra.mxu0 0.0
    %1515 = vmatprep.subr.mxu0 0.0
    %1516 = vmatpush1.msra.mxu0 0.0
    %1517 = vmatprep.subr.mxu0 0.0
    %v1518 = vand.u32 %v1157, 4294901760
    %v1519 = vsub.f32 %v1157, %v1518
    %v1520 = vand.u32 %v1519, 4294901760
    %1521 = vmatpush1.msra.mxu0 %v1520
    %1522 = vmatprep.subr.mxu0 0.0
    %v1523 = vand.u32 %v1151, 4294901760
    %v1524 = vsub.f32 %v1151, %v1523
    %v1525 = vand.u32 %v1524, 4294901760
    %1526 = vmatpush1.msra.mxu0 %v1525
    %1527 = vmatprep.subr.mxu0 0.0
    %v1528 = vand.u32 %v1150, 4294901760
    %v1529 = vsub.f32 %v1150, %v1528
    %v1530 = vand.u32 %v1529, 4294901760
    %1531 = vmatpush1.msra.mxu0 %v1530
    %1532 = vmatprep.subr.mxu0 0.0
    %v1533 = vand.u32 %v1149, 4294901760
    %v1534 = vsub.f32 %v1149, %v1533
    %v1535 = vand.u32 %v1534, 4294901760
    %1536 = vmatpush1.msra.mxu0 %v1535
    %1537 = vmatprep.subr.mxu0 0.0
    %v1538 = vand.u32 %v1148, 4294901760
    %v1539 = vsub.f32 %v1148, %v1538
    %v1540 = vand.u32 %v1539, 4294901760
    %1541 = vmatpush1.msra.mxu0 %v1540
    %1542 = vmatprep.subr.mxu0 0.0
    %1543 = vmatpush2.msra.mxu0 0.0
    %1544 = vmatprep.subr.mxu0 0.0
    %1545 = vmatpush2.msra.mxu0 0.0
    %1546 = vmatprep.subr.mxu0 0.0
    %1547 = vmatpush2.msra.mxu0 0.0
    %1548 = vmatprep.subr.mxu0 0.0
    %1549 = vmatpush2.msra.mxu0 0.0
    %1550 = vmatprep.subr.mxu0 0.0
    %1551 = vmatpush2.msra.mxu0 0.0
    %1552 = vmatprep.subr.mxu0 0.0
    %1553 = vmatpush2.msra.mxu0 0.0
    %1554 = vmatprep.subr.mxu0 0.0
    %1555 = vmatpush2.msra.mxu0 0.0
    %1556 = vmatprep.subr.mxu0 0.0
    %1557 = vmatpush2.msra.mxu0 0.0
    %1558 = vmatprep.subr.mxu0 0.0
    %1559 = vmatpush2.msra.mxu0 0.0
    %1560 = vmatprep.subr.mxu0 0.0
    %1561 = vmatpush2.msra.mxu0 0.0
    %1562 = vmatprep.subr.mxu0 0.0
    %1563 = vmatpush2.msra.mxu0 0.0
    %1564 = vmatprep.subr.mxu0 0.0
    %1565 = vmatpush2.msra.mxu0 0.0
    %1566 = vmatprep.subr.mxu0 0.0
    %1567 = vmatpush2.msra.mxu0 0.0
    %1568 = vmatprep.subr.mxu0 0.0
    %1569 = vmatpush2.msra.mxu0 0.0
    %1570 = vmatprep.subr.mxu0 0.0
    %1571 = vmatpush2.msra.mxu0 0.0
    %1572 = vmatprep.subr.mxu0 0.0
    %1573 = vmatpush2.msra.mxu0 0.0
    %1574 = vmatprep.mubr.f32.mxu0 0.0
    %v1575 = vand.u32 %v1154, 4294901760
    %1576 = vmatmul.mubr.f32.gmra.mxu0 %v1575
    %v1577 = vpop.f32.mrf.mxu0
    %v1578 = vadd.f32 %v1492, %v1577
    %v1579 = vpop.f32.mrf.mxu0
    %1580 = vdwg.mxu0
    %1581 = vmatprep.subr.mxu0 0.0
    %1582 = vmatpush1.msra.mxu0 0.0
    %1583 = vmatprep.subr.mxu0 0.0
    %1584 = vmatpush1.msra.mxu0 0.0
    %1585 = vmatprep.subr.mxu0 0.0
    %1586 = vmatpush1.msra.mxu0 0.0
    %1587 = vmatprep.subr.mxu0 0.0
    %1588 = vmatpush1.msra.mxu0 0.0
    %1589 = vmatprep.subr.mxu0 0.0
    %1590 = vmatpush1.msra.mxu0 0.0
    %1591 = vmatprep.subr.mxu0 0.0
    %1592 = vmatpush1.msra.mxu0 0.0
    %1593 = vmatprep.subr.mxu0 0.0
    %1594 = vmatpush1.msra.mxu0 0.0
    %1595 = vmatprep.subr.mxu0 0.0
    %1596 = vmatpush1.msra.mxu0 0.0
    %1597 = vmatprep.subr.mxu0 0.0
    %1598 = vmatpush1.msra.mxu0 0.0
    %1599 = vmatprep.subr.mxu0 0.0
    %1600 = vmatpush1.msra.mxu0 0.0
    %1601 = vmatprep.subr.mxu0 0.0
    %1602 = vmatpush1.msra.mxu0 0.0
    %1603 = vmatprep.subr.mxu0 0.0
    %v1604 = vand.u32 %v1157, 4294901760
    %1605 = vmatpush1.msra.mxu0 %v1604
    %1606 = vmatprep.subr.mxu0 0.0
    %v1607 = vand.u32 %v1151, 4294901760
    %1608 = vmatpush1.msra.mxu0 %v1607
    %1609 = vmatprep.subr.mxu0 0.0
    %v1610 = vand.u32 %v1150, 4294901760
    %1611 = vmatpush1.msra.mxu0 %v1610
    %1612 = vmatprep.subr.mxu0 0.0
    %v1613 = vand.u32 %v1149, 4294901760
    %1614 = vmatpush1.msra.mxu0 %v1613
    %1615 = vmatprep.subr.mxu0 0.0
    %v1616 = vand.u32 %v1148, 4294901760
    %1617 = vmatpush1.msra.mxu0 %v1616
    %1618 = vmatprep.subr.mxu0 0.0
    %1619 = vmatpush2.msra.mxu0 0.0
    %1620 = vmatprep.subr.mxu0 0.0
    %1621 = vmatpush2.msra.mxu0 0.0
    %1622 = vmatprep.subr.mxu0 0.0
    %1623 = vmatpush2.msra.mxu0 0.0
    %1624 = vmatprep.subr.mxu0 0.0
    %1625 = vmatpush2.msra.mxu0 0.0
    %1626 = vmatprep.subr.mxu0 0.0
    %1627 = vmatpush2.msra.mxu0 0.0
    %1628 = vmatprep.subr.mxu0 0.0
    %1629 = vmatpush2.msra.mxu0 0.0
    %1630 = vmatprep.subr.mxu0 0.0
    %1631 = vmatpush2.msra.mxu0 0.0
    %1632 = vmatprep.subr.mxu0 0.0
    %1633 = vmatpush2.msra.mxu0 0.0
    %1634 = vmatprep.subr.mxu0 0.0
    %1635 = vmatpush2.msra.mxu0 0.0
    %1636 = vmatprep.subr.mxu0 0.0
    %1637 = vmatpush2.msra.mxu0 0.0
    %1638 = vmatprep.subr.mxu0 0.0
    %1639 = vmatpush2.msra.mxu0 0.0
    %1640 = vmatprep.subr.mxu0 0.0
    %1641 = vmatpush2.msra.mxu0 0.0
    %1642 = vmatprep.subr.mxu0 0.0
    %1643 = vmatpush2.msra.mxu0 0.0
    %1644 = vmatprep.subr.mxu0 0.0
    %1645 = vmatpush2.msra.mxu0 0.0
    %1646 = vmatprep.subr.mxu0 0.0
    %1647 = vmatpush2.msra.mxu0 0.0
    %1648 = vmatprep.subr.mxu0 0.0
    %1649 = vmatpush2.msra.mxu0 0.0
    %1650 = vmatprep.mubr.f32.mxu0 0.0
    %v1651 = vand.u32 %v1154, 4294901760
    %1652 = vmatmul.mubr.f32.gmra.mxu0 %v1651
    %v1653 = vpop.f32.mrf.mxu0
    %v1654 = vadd.f32 %v1578, %v1653
    %v1655 = vpop.f32.mrf.mxu0
    %1656 = vdwg.mxu0
    %vm1657 = vcmask 64512
    %1658 = vst.msk [vmem:[#allocation7] sm:$0xff] %vm1657, %v1654
    %1659 = vst.msk [vmem:[#allocation8] sm:$0xff] %vm596, %v1143
    // Predicated region
    $region30: #{rnn_agent_forward.1} parent=1 // pred_check
      _
    $region31: #{rnn_agent_forward.1} parent=1 // pred_check_branch
      %1661 = sbr.rel (0) target = $region33
    $region32: #{rnn_agent_forward.1} parent=1 // pred_region
      %s1663 = ssub.s32 128, 128
      %1664 = vsyncadd [#allocation6], %s1663
      %s1666 = sshll.u32 [#allocation7], 4
      %s1667 = int_to_ptr.vmem [resolvable:$true] %s1666
      %1669 = dma.vmem_to_hbm [thread:$0]  %s1667, 128, %s5, [#allocation6]
    $region33: #{rnn_agent_forward.1} parent=1 // pred_fallthru
      _
    // Predicated region
    $region34: #{rnn_agent_forward.1} parent=1 // pred_check
      _
    $region35: #{rnn_agent_forward.1} parent=1 // pred_check_branch
      %1671 = sbr.rel (0) target = $region37
    $region36: #{rnn_agent_forward.1} parent=1 // pred_region
      %s1673 = ssub.s32 128, 128
      %1674 = vsyncadd [#allocation9], %s1673
      %s1676 = sshll.u32 [#allocation8], 4
      %s1677 = int_to_ptr.vmem [resolvable:$true] %s1676
      %1679 = dma.vmem_to_hbm [thread:$0]  %s1677, 128, %s6, [#allocation9]
    $region37: #{rnn_agent_forward.1} parent=1 // pred_fallthru
      _
    // Predicated region
    $region38: #{rnn_agent_forward.1} parent=1 // pred_check
      _
    $region39: #{rnn_agent_forward.1} parent=1 // pred_check_branch
      %1681 = sbr.rel (0) target = $region41
    $region40: #{rnn_agent_forward.1} parent=1 // pred_region
      %1682 = dma.done [#allocation6], 128
    $region41: #{rnn_agent_forward.1} parent=1 // pred_fallthru
      _
    // Predicated region
    $region42: #{rnn_agent_forward.1} parent=1 // pred_check
      _
    $region43: #{rnn_agent_forward.1} parent=1 // pred_check_branch
      %1684 = sbr.rel (0) target = $region45
    $region44: #{rnn_agent_forward.1} parent=1 // pred_region
      %1685 = dma.done [#allocation9], 128
    $region45: #{rnn_agent_forward.1} parent=1 // pred_fallthru
      _
    %1686 = vsyncpa [#allocation5], 1
    %1687 = vsyncpa [#allocation6], 1
    %1688 = vsyncpa [#allocation9], 1

</llo_original>
